<compile_context>
chip_gen: v7x
topology: tpu7x:2x2x1
jax: 0.10.0
libtpu: 0.0.40
codegen_flags: <defaults>
</compile_context>

<pallas_src>
import math

import jax
import jax.numpy as jnp
from jax.experimental import pallas as pl
from jax.experimental.pallas import tpu as pltpu

# Problem sizes (small, consistent with the module's forward).
B = 2
T = 8
BT = B * T
FEATURES = 32
EMBED_DIM = 32
HEAD = 8
DH = EMBED_DIM // HEAD
MLP_HIDDEN = 64
EPS = 1e-5                                       # PyTorch nn.LayerNorm default
INV_SQRT_D = 1.0 / math.sqrt(float(FEATURES))    # module scales by sqrt(features), not sqrt(head_dim)

# Power-of-two shifts used to build index masks without integer div/rem.
assert (T & (T - 1)) == 0 and (BT & (BT - 1)) == 0 and (DH & (DH - 1)) == 0
_LOG2_T = int(math.log2(T))
_LOG2_BT = int(math.log2(BT))
_LOG2_DH = int(math.log2(DH))

# Packed-parameter layout (built in init_params, sliced statically in-kernel).
VEC_W = 3 * EMBED_DIM            # widest vector row (the fused q/k/v bias)
COL_QKV = 0                      # w_in[:,   0: 96] = [Wq^T | Wk^T | Wv^T]
COL_WO = 3 * EMBED_DIM           # w_in[:,  96:128] = Wo^T
COL_W1 = COL_WO + FEATURES       # w_in[:, 128:192] = W1^T
ROW_LA1_G, ROW_LA1_B, ROW_BQKV, ROW_BO = 0, 1, 2, 3
ROW_LA2_G, ROW_LA2_B, ROW_B1, ROW_B2 = 4, 5, 6, 7


# ----------------------------- in-kernel helpers -----------------------------
def _erf(v):
    # Abramowitz & Stegun 7.1.26 rational approximation (|err| <= 1.5e-7), built from
    # ops guaranteed to lower on Mosaic (exp, mul, where).  Kept (instead of tanh-GELU)
    # to stay faithful to nn.GELU()'s exact erf; VALU cost is negligible at this size.
    a1, a2, a3, a4, a5 = 0.254829592, -0.284496736, 1.421413741, -1.453152027, 1.061405429
    p = 0.3275911
    sgn = jnp.where(v >= 0.0, 1.0, -1.0)
    av = jnp.abs(v)
    t = 1.0 / (1.0 + p * av)
    poly = ((((a5 * t + a4) * t + a3) * t + a2) * t + a1) * t
    return sgn * (1.0 - poly * jnp.exp(-av * av))


def _gelu(v):
    return 0.5 * v * (1.0 + _erf(v * 0.7071067811865476))


def _layernorm(v, g, b):
    # PyTorch LayerNorm over the last dim: biased variance, eps=1e-5.
    mu = jnp.mean(v, axis=-1, keepdims=True)
    var = jnp.mean((v - mu) * (v - mu), axis=-1, keepdims=True)
    return (v - mu) * jax.lax.rsqrt(var + EPS) * g + b


# --------------------------------- kernel ------------------------------------
def encoder_kernel(x_ref, w_in_ref, w2_ref, vec_ref, o_ref):
    f32 = jnp.float32
    x = x_ref[...].astype(f32)                                    # (BT, F)

    # ---- unpack packed parameters (static slices of VMEM slabs; no extra DMAs) ----
    la1_g = vec_ref[ROW_LA1_G:ROW_LA1_G + 1, 0:FEATURES]
    la1_b = vec_ref[ROW_LA1_B:ROW_LA1_B + 1, 0:FEATURES]
    b_qkv = vec_ref[ROW_BQKV:ROW_BQKV + 1, 0:3 * EMBED_DIM]
    b_o   = vec_ref[ROW_BO:ROW_BO + 1, 0:FEATURES]
    la2_g = vec_ref[ROW_LA2_G:ROW_LA2_G + 1, 0:FEATURES]
    la2_b = vec_ref[ROW_LA2_B:ROW_LA2_B + 1, 0:FEATURES]
    b_1   = vec_ref[ROW_B1:ROW_B1 + 1, 0:MLP_HIDDEN]
    b_2   = vec_ref[ROW_B2:ROW_B2 + 1, 0:FEATURES]
    w_qkv = w_in_ref[:, COL_QKV:COL_QKV + 3 * EMBED_DIM]          # (F, 3E)
    w_o   = w_in_ref[:, COL_WO:COL_WO + FEATURES]                 # (E, F)
    w_1   = w_in_ref[:, COL_W1:COL_W1 + MLP_HIDDEN]               # (F, MLP)
    w_2   = w2_ref[...]                                           # (MLP, F)

    # ---- LayerNorm 1 + fused Q/K/V projection (one MXU dot) ----
    x1 = _layernorm(x, la1_g, la1_b)
    qkv = jnp.dot(x1, w_qkv, preferred_element_type=f32) + b_qkv  # (BT, 3E)
    q = qkv[:, 0:EMBED_DIM]
    k = qkv[:, EMBED_DIM:2 * EMBED_DIM]
    v = qkv[:, 2 * EMBED_DIM:3 * EMBED_DIM]

    # ---- head-batched attention, all-2D formulation ----
    # Stacked row m = h*BT + n holds (head h, flat token n), n = b*T + t.
    #   rep  [m, n] = 1  iff n == m % BT          (replicate each token row per head)
    #   hmask[m, d] = 1  iff d // DH == m // BT   (head h owns columns [h*DH,(h+1)*DH))
    #   sel  [n, m] = 1  iff m % BT == n          (gather each head's owned columns back)
    #   Qm = (rep @ Q) * hmask                    -> row m = Q[n] restricted to head h
    #   S  = Qm @ K^T / sqrt(features)            -> exact head-h scores vs every key
    #   block-diagonal batch mask (-1e30 on cross-batch keys), row-wise softmax
    #   C  = (P @ V) * hmask ; attn = sel @ C     -> heads concatenated exactly like
    #                                                einsum('bhij,bhjf->bihf').flatten(2)
    HB = HEAD * BT
    m_i = jax.lax.broadcasted_iota(jnp.int32, (HB, BT), 0)
    j_i = jax.lax.broadcasted_iota(jnp.int32, (HB, BT), 1)
    tok = jnp.bitwise_and(m_i, BT - 1)                                      # n = m % BT
    rep = jnp.where(tok == j_i, 1.0, 0.0).astype(f32)                       # (HB, BT)
    same_batch = jnp.right_shift(tok, _LOG2_T) == jnp.right_shift(j_i, _LOG2_T)

    hm_m = jax.lax.broadcasted_iota(jnp.int32, (HB, EMBED_DIM), 0)
    hm_d = jax.lax.broadcasted_iota(jnp.int32, (HB, EMBED_DIM), 1)
    hmask = jnp.where(jnp.right_shift(hm_d, _LOG2_DH) ==
                      jnp.right_shift(hm_m, _LOG2_BT), 1.0, 0.0).astype(f32)  # (HB, E)

    s_n = jax.lax.broadcasted_iota(jnp.int32, (BT, HB), 0)
    s_m = jax.lax.broadcasted_iota(jnp.int32, (BT, HB), 1)
    sel = jnp.where(jnp.bitwise_and(s_m, BT - 1) == s_n, 1.0, 0.0).astype(f32)  # (BT, HB)

    qm = jnp.dot(rep, q, preferred_element_type=f32) * hmask                # (HB, E)
    s = jnp.dot(qm, k.T, preferred_element_type=f32) * INV_SQRT_D           # (HB, BT)
    s = jnp.where(same_batch, s, -1e30)                                     # per-batch attention
    s = s - jnp.max(s, axis=-1, keepdims=True)
    e = jnp.exp(s)
    p = e * pl.reciprocal(jnp.sum(e, axis=-1, keepdims=True), approx=True)  # softmax over keys
    ctx = jnp.dot(p, v, preferred_element_type=f32) * hmask                 # (HB, E)
    attn = jnp.dot(sel, ctx, preferred_element_type=f32)                    # (BT, E)

    # ---- output projection + residual 1 (dropout p=0 -> identity) ----
    y = jnp.dot(attn, w_o, preferred_element_type=f32) + b_o + x

    # ---- LayerNorm 2 + MLP (Linear -> GELU -> Linear -> GELU) + residual 2 ----
    x2 = _layernorm(y, la2_g, la2_b)
    h1 = _gelu(jnp.dot(x2, w_1, preferred_element_type=f32) + b_1)
    h2 = _gelu(jnp.dot(h1, w_2, preferred_element_type=f32) + b_2)
    o_ref[...] = (h2 + y).astype(o_ref.dtype)


# -------------------------------- wrapper -------------------------------------
def transformer_encoder(x, params):
    bsz, t, f = x.shape
    x2d = x.reshape(bsz * t, f)            # host-side layout glue (free in XLA)
    vmem = pl.BlockSpec(memory_space=pltpu.MemorySpace.VMEM)
    out2d = pl.pallas_call(
        encoder_kernel,
        out_shape=jax.ShapeDtypeStruct((bsz * t, f), x.dtype),
        in_specs=[vmem, vmem, vmem, vmem],     # whole arrays in VMEM, single invocation
        out_specs=vmem,
        # TODO(synk): if scaled to long sequences, reintroduce a sequence-tiled grid and
        # re-derive tile sizes against v7x's 64 MiB VMEM (not v5e/v6e's 128 MiB).
    )(x2d, params["w_in"], params["w2_t"], params["vecs"])
    return out2d.reshape(bsz, t, f)


# ------------------------- deterministic parameter init -----------------------
def init_params(key):
    def linear(k, out_dim, in_dim):
        kw, kb = jax.random.split(k)
        lim = 1.0 / math.sqrt(in_dim)                    # PyTorch nn.Linear default init
        w = jax.random.uniform(kw, (out_dim, in_dim), jnp.float32, -lim, lim)
        b = jax.random.uniform(kb, (out_dim,), jnp.float32, -lim, lim)
        return w, b

    ks = jax.random.split(key, 6)
    wq, bq = linear(ks[0], EMBED_DIM, FEATURES)
    wk, bk = linear(ks[1], EMBED_DIM, FEATURES)
    wv, bv = linear(ks[2], EMBED_DIM, FEATURES)
    wo, bo = linear(ks[3], FEATURES, EMBED_DIM)
    w1, b1 = linear(ks[4], MLP_HIDDEN, FEATURES)
    w2, b2 = linear(ks[5], FEATURES, MLP_HIDDEN)

    la1_g = jnp.ones((FEATURES,), jnp.float32)
    la1_b = jnp.zeros((FEATURES,), jnp.float32)
    la2_g = jnp.ones((FEATURES,), jnp.float32)
    la2_b = jnp.zeros((FEATURES,), jnp.float32)

    # Pack: weights are pre-transposed so the kernel computes y = x @ W^T + b, matching
    # PyTorch; all (32-row) weight matrices are concatenated column-wise into one slab,
    # and all bias/LN vectors into one padded (8, 96) slab.
    w_in = jnp.concatenate([wq.T, wk.T, wv.T, wo.T, w1.T], axis=1)   # (32, 192)
    w2_t = w2.T                                                      # (64, 32)

    def row(vec):
        return jnp.pad(vec, (0, VEC_W - vec.shape[0]))[None, :]

    vecs = jnp.concatenate([
        row(la1_g), row(la1_b), row(jnp.concatenate([bq, bk, bv])), row(bo),
        row(la2_g), row(la2_b), row(b1), row(b2)], axis=0)           # (8, 96)

    return {"w_in": w_in, "w2_t": w2_t, "vecs": vecs}


if __name__ == "__main__":
    key = jax.random.PRNGKey(0)
    kx, kp = jax.random.split(key)
    x = jax.random.normal(kx, (B, T, FEATURES), dtype=jnp.float32)
    params = init_params(kp)

    out = transformer_encoder(x, params)
    out = jax.block_until_ready(out)
    assert out.shape == (B, T, FEATURES) and out.dtype == jnp.float32
    assert bool(jnp.all(jnp.isfinite(out)))
    print("KERNEL_OK")
</pallas_src>

<mosaic_0001>
module attributes {stable_mosaic.version = 11 : i64} {
  func.func @encoder_kernel(%arg0: memref<16x32xf32, #tpu.memory_space<vmem>>, %arg1: memref<32x192xf32, #tpu.memory_space<vmem>>, %arg2: memref<64x32xf32, #tpu.memory_space<vmem>>, %arg3: memref<8x96xf32, #tpu.memory_space<vmem>>, %arg4: memref<16x32xf32, #tpu.memory_space<vmem>>) attributes {dimension_semantics = [], scalar_prefetch = 0 : i64, scratch_operands = 0 : i64, tpu.core_type = #tpu.core_type<tc>} {
    %c0 = arith.constant 0 : index
    %c0_0 = arith.constant 0 : index
    %0 = vector.load %arg0[%c0, %c0_0] : memref<16x32xf32, #tpu.memory_space<vmem>>, vector<16x32xf32>
    %c0_1 = arith.constant 0 : index
    %c0_2 = arith.constant 0 : index
    %1 = vector.load %arg3[%c0_1, %c0_2] : memref<8x96xf32, #tpu.memory_space<vmem>>, vector<1x32xf32>
    %c1 = arith.constant 1 : index
    %c0_3 = arith.constant 0 : index
    %2 = vector.load %arg3[%c1, %c0_3] : memref<8x96xf32, #tpu.memory_space<vmem>>, vector<1x32xf32>
    %c2 = arith.constant 2 : index
    %c0_4 = arith.constant 0 : index
    %3 = vector.load %arg3[%c2, %c0_4] : memref<8x96xf32, #tpu.memory_space<vmem>>, vector<1x96xf32>
    %c3 = arith.constant 3 : index
    %c0_5 = arith.constant 0 : index
    %4 = vector.load %arg3[%c3, %c0_5] : memref<8x96xf32, #tpu.memory_space<vmem>>, vector<1x32xf32>
    %c4 = arith.constant 4 : index
    %c0_6 = arith.constant 0 : index
    %5 = vector.load %arg3[%c4, %c0_6] : memref<8x96xf32, #tpu.memory_space<vmem>>, vector<1x32xf32>
    %c5 = arith.constant 5 : index
    %c0_7 = arith.constant 0 : index
    %6 = vector.load %arg3[%c5, %c0_7] : memref<8x96xf32, #tpu.memory_space<vmem>>, vector<1x32xf32>
    %c6 = arith.constant 6 : index
    %c0_8 = arith.constant 0 : index
    %7 = vector.load %arg3[%c6, %c0_8] : memref<8x96xf32, #tpu.memory_space<vmem>>, vector<1x64xf32>
    %c7 = arith.constant 7 : index
    %c0_9 = arith.constant 0 : index
    %8 = vector.load %arg3[%c7, %c0_9] : memref<8x96xf32, #tpu.memory_space<vmem>>, vector<1x32xf32>
    %c0_10 = arith.constant 0 : index
    %c0_11 = arith.constant 0 : index
    %9 = vector.load %arg1[%c0_10, %c0_11] : memref<32x192xf32, #tpu.memory_space<vmem>>, vector<32x96xf32>
    %c0_12 = arith.constant 0 : index
    %c96 = arith.constant 96 : index
    %10 = vector.load %arg1[%c0_12, %c96] : memref<32x192xf32, #tpu.memory_space<vmem>>, vector<32x32xf32>
    %c0_13 = arith.constant 0 : index
    %c128 = arith.constant 128 : index
    %11 = vector.load %arg1[%c0_13, %c128] : memref<32x192xf32, #tpu.memory_space<vmem>>, vector<32x64xf32>
    %c0_14 = arith.constant 0 : index
    %c0_15 = arith.constant 0 : index
    %12 = vector.load %arg2[%c0_14, %c0_15] : memref<64x32xf32, #tpu.memory_space<vmem>>, vector<64x32xf32>
    %cst = arith.constant dense<0.000000e+00> : vector<16xf32>
    %13 = vector.multi_reduction <add>, %0, %cst [1] : vector<16x32xf32> to vector<16xf32>
    %14 = vector.shape_cast %13 : vector<16xf32> to vector<16x1xf32>
    %cst_16 = arith.constant 3.200000e+01 : f32
    %15 = vector.broadcast %cst_16 : f32 to vector<16x1xf32>
    %16 = arith.divf %14, %15 : vector<16x1xf32>
    %17 = vector.broadcast %16 : vector<16x1xf32> to vector<16x32xf32>
    %18 = arith.subf %0, %17 : vector<16x32xf32>
    %19 = vector.broadcast %16 : vector<16x1xf32> to vector<16x32xf32>
    %20 = arith.subf %0, %19 : vector<16x32xf32>
    %21 = arith.mulf %18, %20 : vector<16x32xf32>
    %cst_17 = arith.constant dense<0.000000e+00> : vector<16xf32>
    %22 = vector.multi_reduction <add>, %21, %cst_17 [1] : vector<16x32xf32> to vector<16xf32>
    %23 = vector.shape_cast %22 : vector<16xf32> to vector<16x1xf32>
    %cst_18 = arith.constant 3.200000e+01 : f32
    %24 = vector.broadcast %cst_18 : f32 to vector<16x1xf32>
    %25 = arith.divf %23, %24 : vector<16x1xf32>
    %26 = vector.broadcast %16 : vector<16x1xf32> to vector<16x32xf32>
    %27 = arith.subf %0, %26 : vector<16x32xf32>
    %cst_19 = arith.constant 9.99999974E-6 : f32
    %28 = vector.broadcast %cst_19 : f32 to vector<16x1xf32>
    %29 = arith.addf %25, %28 : vector<16x1xf32>
    %30 = math.rsqrt %29 : vector<16x1xf32>
    %31 = vector.broadcast %30 : vector<16x1xf32> to vector<16x32xf32>
    %32 = arith.mulf %27, %31 : vector<16x32xf32>
    %33 = vector.broadcast %1 : vector<1x32xf32> to vector<16x32xf32>
    %34 = arith.mulf %32, %33 : vector<16x32xf32>
    %35 = vector.broadcast %2 : vector<1x32xf32> to vector<16x32xf32>
    %36 = arith.addf %34, %35 : vector<16x32xf32>
    %cst_20 = arith.constant dense<0.000000e+00> : vector<16x96xf32>
    %37 = tpu.matmul %36, %9, %cst_20 {dimension_numbers = #tpu.dot_dimension_numbers<[1], [0], [0], [1], [0, 0, 1, 1], [], []>} : vector<16x32xf32>, vector<32x96xf32>, vector<16x96xf32> -> vector<16x96xf32>
    %38 = vector.broadcast %3 : vector<1x96xf32> to vector<16x96xf32>
    %39 = arith.addf %37, %38 : vector<16x96xf32>
    %40 = vector.extract_strided_slice %39 {offsets = [0, 0], sizes = [16, 32], strides = [1, 1]} : vector<16x96xf32> to vector<16x32xf32>
    %41 = vector.extract_strided_slice %39 {offsets = [0, 32], sizes = [16, 32], strides = [1, 1]} : vector<16x96xf32> to vector<16x32xf32>
    %42 = vector.extract_strided_slice %39 {offsets = [0, 64], sizes = [16, 32], strides = [1, 1]} : vector<16x96xf32> to vector<16x32xf32>
    %43 = tpu.iota {dimensions = array<i32: 0>} : vector<128x16xi32>
    %44 = tpu.iota {dimensions = array<i32: 1>} : vector<128x16xi32>
    %c15_i32 = arith.constant 15 : i32
    %45 = vector.broadcast %c15_i32 : i32 to vector<128x16xi32>
    %46 = arith.andi %43, %45 : vector<128x16xi32>
    %47 = arith.cmpi eq, %46, %44 : vector<128x16xi32>
    %cst_21 = arith.constant 1.000000e+00 : f32
    %cst_22 = arith.constant 0.000000e+00 : f32
    %48 = vector.broadcast %cst_21 : f32 to vector<128x16xf32>
    %49 = vector.broadcast %cst_22 : f32 to vector<128x16xf32>
    %50 = arith.select %47, %48, %49 : vector<128x16xi1>, vector<128x16xf32>
    %c3_i32 = arith.constant 3 : i32
    %51 = vector.broadcast %c3_i32 : i32 to vector<128x16xi32>
    %52 = arith.shrsi %46, %51 : vector<128x16xi32>
    %c3_i32_23 = arith.constant 3 : i32
    %53 = vector.broadcast %c3_i32_23 : i32 to vector<128x16xi32>
    %54 = arith.shrsi %44, %53 : vector<128x16xi32>
    %55 = arith.cmpi eq, %52, %54 : vector<128x16xi32>
    %56 = tpu.iota {dimensions = array<i32: 0>} : vector<128x32xi32>
    %57 = tpu.iota {dimensions = array<i32: 1>} : vector<128x32xi32>
    %c2_i32 = arith.constant 2 : i32
    %58 = vector.broadcast %c2_i32 : i32 to vector<128x32xi32>
    %59 = arith.shrsi %57, %58 : vector<128x32xi32>
    %c4_i32 = arith.constant 4 : i32
    %60 = vector.broadcast %c4_i32 : i32 to vector<128x32xi32>
    %61 = arith.shrsi %56, %60 : vector<128x32xi32>
    %62 = arith.cmpi eq, %59, %61 : vector<128x32xi32>
    %cst_24 = arith.constant 1.000000e+00 : f32
    %cst_25 = arith.constant 0.000000e+00 : f32
    %63 = vector.broadcast %cst_24 : f32 to vector<128x32xf32>
    %64 = vector.broadcast %cst_25 : f32 to vector<128x32xf32>
    %65 = arith.select %62, %63, %64 : vector<128x32xi1>, vector<128x32xf32>
    %66 = tpu.iota {dimensions = array<i32: 0>} : vector<16x128xi32>
    %67 = tpu.iota {dimensions = array<i32: 1>} : vector<16x128xi32>
    %c15_i32_26 = arith.constant 15 : i32
    %68 = vector.broadcast %c15_i32_26 : i32 to vector<16x128xi32>
    %69 = arith.andi %67, %68 : vector<16x128xi32>
    %70 = arith.cmpi eq, %69, %66 : vector<16x128xi32>
    %cst_27 = arith.constant 1.000000e+00 : f32
    %cst_28 = arith.constant 0.000000e+00 : f32
    %71 = vector.broadcast %cst_27 : f32 to vector<16x128xf32>
    %72 = vector.broadcast %cst_28 : f32 to vector<16x128xf32>
    %73 = arith.select %70, %71, %72 : vector<16x128xi1>, vector<16x128xf32>
    %cst_29 = arith.constant dense<0.000000e+00> : vector<128x32xf32>
    %74 = tpu.matmul %50, %40, %cst_29 {dimension_numbers = #tpu.dot_dimension_numbers<[1], [0], [0], [1], [0, 0, 1, 1], [], []>} : vector<128x16xf32>, vector<16x32xf32>, vector<128x32xf32> -> vector<128x32xf32>
    %75 = arith.mulf %74, %65 : vector<128x32xf32>
    %76 = tpu.transpose %41, [1, 0] : vector<16x32xf32> -> vector<32x16xf32>
    %cst_30 = arith.constant dense<0.000000e+00> : vector<128x16xf32>
    %77 = tpu.matmul %75, %76, %cst_30 {dimension_numbers = #tpu.dot_dimension_numbers<[1], [0], [0], [1], [0, 0, 1, 1], [], []>} : vector<128x32xf32>, vector<32x16xf32>, vector<128x16xf32> -> vector<128x16xf32>
    %cst_31 = arith.constant 0.176776692 : f32
    %78 = vector.broadcast %cst_31 : f32 to vector<128x16xf32>
    %79 = arith.mulf %77, %78 : vector<128x16xf32>
    %cst_32 = arith.constant -1.000000e+30 : f32
    %80 = vector.broadcast %cst_32 : f32 to vector<128x16xf32>
    %81 = arith.select %55, %79, %80 : vector<128x16xi1>, vector<128x16xf32>
    %cst_33 = arith.constant dense<0xFF800000> : vector<128xf32>
    %82 = vector.multi_reduction <maximumf>, %81, %cst_33 [1] : vector<128x16xf32> to vector<128xf32>
    %83 = vector.shape_cast %82 : vector<128xf32> to vector<128x1xf32>
    %84 = vector.broadcast %83 : vector<128x1xf32> to vector<128x16xf32>
    %85 = arith.subf %81, %84 : vector<128x16xf32>
    %86 = math.exp %85 : vector<128x16xf32>
    %cst_34 = arith.constant dense<0.000000e+00> : vector<128xf32>
    %87 = vector.multi_reduction <add>, %86, %cst_34 [1] : vector<128x16xf32> to vector<128xf32>
    %88 = vector.shape_cast %87 : vector<128xf32> to vector<128x1xf32>
    %89 = tpu.reciprocal %88 {approx = true} : vector<128x1xf32> -> vector<128x1xf32>
    %90 = vector.broadcast %89 : vector<128x1xf32> to vector<128x16xf32>
    %91 = arith.mulf %86, %90 : vector<128x16xf32>
    %cst_35 = arith.constant dense<0.000000e+00> : vector<128x32xf32>
    %92 = tpu.matmul %91, %42, %cst_35 {dimension_numbers = #tpu.dot_dimension_numbers<[1], [0], [0], [1], [0, 0, 1, 1], [], []>} : vector<128x16xf32>, vector<16x32xf32>, vector<128x32xf32> -> vector<128x32xf32>
    %93 = arith.mulf %92, %65 : vector<128x32xf32>
    %cst_36 = arith.constant dense<0.000000e+00> : vector<16x32xf32>
    %94 = tpu.matmul %73, %93, %cst_36 {dimension_numbers = #tpu.dot_dimension_numbers<[1], [0], [0], [1], [0, 0, 1, 1], [], []>} : vector<16x128xf32>, vector<128x32xf32>, vector<16x32xf32> -> vector<16x32xf32>
    %cst_37 = arith.constant dense<0.000000e+00> : vector<16x32xf32>
    %95 = tpu.matmul %94, %10, %cst_37 {dimension_numbers = #tpu.dot_dimension_numbers<[1], [0], [0], [1], [0, 0, 1, 1], [], []>} : vector<16x32xf32>, vector<32x32xf32>, vector<16x32xf32> -> vector<16x32xf32>
    %96 = vector.broadcast %4 : vector<1x32xf32> to vector<16x32xf32>
    %97 = arith.addf %95, %96 : vector<16x32xf32>
    %98 = arith.addf %97, %0 : vector<16x32xf32>
    %cst_38 = arith.constant dense<0.000000e+00> : vector<16xf32>
    %99 = vector.multi_reduction <add>, %98, %cst_38 [1] : vector<16x32xf32> to vector<16xf32>
    %100 = vector.shape_cast %99 : vector<16xf32> to vector<16x1xf32>
    %cst_39 = arith.constant 3.200000e+01 : f32
    %101 = vector.broadcast %cst_39 : f32 to vector<16x1xf32>
    %102 = arith.divf %100, %101 : vector<16x1xf32>
    %103 = vector.broadcast %102 : vector<16x1xf32> to vector<16x32xf32>
    %104 = arith.subf %98, %103 : vector<16x32xf32>
    %105 = vector.broadcast %102 : vector<16x1xf32> to vector<16x32xf32>
    %106 = arith.subf %98, %105 : vector<16x32xf32>
    %107 = arith.mulf %104, %106 : vector<16x32xf32>
    %cst_40 = arith.constant dense<0.000000e+00> : vector<16xf32>
    %108 = vector.multi_reduction <add>, %107, %cst_40 [1] : vector<16x32xf32> to vector<16xf32>
    %109 = vector.shape_cast %108 : vector<16xf32> to vector<16x1xf32>
    %cst_41 = arith.constant 3.200000e+01 : f32
    %110 = vector.broadcast %cst_41 : f32 to vector<16x1xf32>
    %111 = arith.divf %109, %110 : vector<16x1xf32>
    %112 = vector.broadcast %102 : vector<16x1xf32> to vector<16x32xf32>
    %113 = arith.subf %98, %112 : vector<16x32xf32>
    %cst_42 = arith.constant 9.99999974E-6 : f32
    %114 = vector.broadcast %cst_42 : f32 to vector<16x1xf32>
    %115 = arith.addf %111, %114 : vector<16x1xf32>
    %116 = math.rsqrt %115 : vector<16x1xf32>
    %117 = vector.broadcast %116 : vector<16x1xf32> to vector<16x32xf32>
    %118 = arith.mulf %113, %117 : vector<16x32xf32>
    %119 = vector.broadcast %5 : vector<1x32xf32> to vector<16x32xf32>
    %120 = arith.mulf %118, %119 : vector<16x32xf32>
    %121 = vector.broadcast %6 : vector<1x32xf32> to vector<16x32xf32>
    %122 = arith.addf %120, %121 : vector<16x32xf32>
    %cst_43 = arith.constant dense<0.000000e+00> : vector<16x64xf32>
    %123 = tpu.matmul %122, %11, %cst_43 {dimension_numbers = #tpu.dot_dimension_numbers<[1], [0], [0], [1], [0, 0, 1, 1], [], []>} : vector<16x32xf32>, vector<32x64xf32>, vector<16x64xf32> -> vector<16x64xf32>
    %124 = vector.broadcast %7 : vector<1x64xf32> to vector<16x64xf32>
    %125 = arith.addf %123, %124 : vector<16x64xf32>
    %cst_44 = arith.constant 5.000000e-01 : f32
    %126 = vector.broadcast %cst_44 : f32 to vector<16x64xf32>
    %127 = arith.mulf %126, %125 : vector<16x64xf32>
    %cst_45 = arith.constant 0.707106769 : f32
    %128 = vector.broadcast %cst_45 : f32 to vector<16x64xf32>
    %129 = arith.mulf %125, %128 : vector<16x64xf32>
    %cst_46 = arith.constant 0.000000e+00 : f32
    %130 = vector.broadcast %cst_46 : f32 to vector<16x64xf32>
    %131 = arith.cmpf oge, %129, %130 : vector<16x64xf32>
    %cst_47 = arith.constant 1.000000e+00 : f32
    %cst_48 = arith.constant -1.000000e+00 : f32
    %132 = vector.broadcast %cst_47 : f32 to vector<16x64xf32>
    %133 = vector.broadcast %cst_48 : f32 to vector<16x64xf32>
    %134 = arith.select %131, %132, %133 : vector<16x64xi1>, vector<16x64xf32>
    %135 = math.absf %129 : vector<16x64xf32>
    %cst_49 = arith.constant 0.327591091 : f32
    %136 = vector.broadcast %cst_49 : f32 to vector<16x64xf32>
    %137 = arith.mulf %136, %135 : vector<16x64xf32>
    %cst_50 = arith.constant 1.000000e+00 : f32
    %138 = vector.broadcast %cst_50 : f32 to vector<16x64xf32>
    %139 = arith.addf %138, %137 : vector<16x64xf32>
    %cst_51 = arith.constant 1.000000e+00 : f32
    %140 = vector.broadcast %cst_51 : f32 to vector<16x64xf32>
    %141 = arith.divf %140, %139 : vector<16x64xf32>
    %cst_52 = arith.constant 1.06140542 : f32
    %142 = vector.broadcast %cst_52 : f32 to vector<16x64xf32>
    %143 = arith.mulf %142, %141 : vector<16x64xf32>
    %cst_53 = arith.constant -1.45315206 : f32
    %144 = vector.broadcast %cst_53 : f32 to vector<16x64xf32>
    %145 = arith.addf %143, %144 : vector<16x64xf32>
    %146 = arith.mulf %145, %141 : vector<16x64xf32>
    %cst_54 = arith.constant 1.42141378 : f32
    %147 = vector.broadcast %cst_54 : f32 to vector<16x64xf32>
    %148 = arith.addf %146, %147 : vector<16x64xf32>
    %149 = arith.mulf %148, %141 : vector<16x64xf32>
    %cst_55 = arith.constant -0.284496725 : f32
    %150 = vector.broadcast %cst_55 : f32 to vector<16x64xf32>
    %151 = arith.addf %149, %150 : vector<16x64xf32>
    %152 = arith.mulf %151, %141 : vector<16x64xf32>
    %cst_56 = arith.constant 0.254829586 : f32
    %153 = vector.broadcast %cst_56 : f32 to vector<16x64xf32>
    %154 = arith.addf %152, %153 : vector<16x64xf32>
    %155 = arith.mulf %154, %141 : vector<16x64xf32>
    %cst_57 = arith.constant 0.000000e+00 : f32
    %156 = vector.broadcast %cst_57 : f32 to vector<16x64xf32>
    %157 = arith.subf %156, %135 : vector<16x64xf32>
    %158 = arith.mulf %157, %135 : vector<16x64xf32>
    %159 = math.exp %158 : vector<16x64xf32>
    %160 = arith.mulf %155, %159 : vector<16x64xf32>
    %cst_58 = arith.constant 1.000000e+00 : f32
    %161 = vector.broadcast %cst_58 : f32 to vector<16x64xf32>
    %162 = arith.subf %161, %160 : vector<16x64xf32>
    %163 = arith.mulf %134, %162 : vector<16x64xf32>
    %cst_59 = arith.constant 1.000000e+00 : f32
    %164 = vector.broadcast %cst_59 : f32 to vector<16x64xf32>
    %165 = arith.addf %164, %163 : vector<16x64xf32>
    %166 = arith.mulf %127, %165 : vector<16x64xf32>
    %cst_60 = arith.constant dense<0.000000e+00> : vector<16x32xf32>
    %167 = tpu.matmul %166, %12, %cst_60 {dimension_numbers = #tpu.dot_dimension_numbers<[1], [0], [0], [1], [0, 0, 1, 1], [], []>} : vector<16x64xf32>, vector<64x32xf32>, vector<16x32xf32> -> vector<16x32xf32>
    %168 = vector.broadcast %8 : vector<1x32xf32> to vector<16x32xf32>
    %169 = arith.addf %167, %168 : vector<16x32xf32>
    %cst_61 = arith.constant 5.000000e-01 : f32
    %170 = vector.broadcast %cst_61 : f32 to vector<16x32xf32>
    %171 = arith.mulf %170, %169 : vector<16x32xf32>
    %cst_62 = arith.constant 0.707106769 : f32
    %172 = vector.broadcast %cst_62 : f32 to vector<16x32xf32>
    %173 = arith.mulf %169, %172 : vector<16x32xf32>
    %cst_63 = arith.constant 0.000000e+00 : f32
    %174 = vector.broadcast %cst_63 : f32 to vector<16x32xf32>
    %175 = arith.cmpf oge, %173, %174 : vector<16x32xf32>
    %cst_64 = arith.constant 1.000000e+00 : f32
    %cst_65 = arith.constant -1.000000e+00 : f32
    %176 = vector.broadcast %cst_64 : f32 to vector<16x32xf32>
    %177 = vector.broadcast %cst_65 : f32 to vector<16x32xf32>
    %178 = arith.select %175, %176, %177 : vector<16x32xi1>, vector<16x32xf32>
    %179 = math.absf %173 : vector<16x32xf32>
    %cst_66 = arith.constant 0.327591091 : f32
    %180 = vector.broadcast %cst_66 : f32 to vector<16x32xf32>
    %181 = arith.mulf %180, %179 : vector<16x32xf32>
    %cst_67 = arith.constant 1.000000e+00 : f32
    %182 = vector.broadcast %cst_67 : f32 to vector<16x32xf32>
    %183 = arith.addf %182, %181 : vector<16x32xf32>
    %cst_68 = arith.constant 1.000000e+00 : f32
    %184 = vector.broadcast %cst_68 : f32 to vector<16x32xf32>
    %185 = arith.divf %184, %183 : vector<16x32xf32>
    %cst_69 = arith.constant 1.06140542 : f32
    %186 = vector.broadcast %cst_69 : f32 to vector<16x32xf32>
    %187 = arith.mulf %186, %185 : vector<16x32xf32>
    %cst_70 = arith.constant -1.45315206 : f32
    %188 = vector.broadcast %cst_70 : f32 to vector<16x32xf32>
    %189 = arith.addf %187, %188 : vector<16x32xf32>
    %190 = arith.mulf %189, %185 : vector<16x32xf32>
    %cst_71 = arith.constant 1.42141378 : f32
    %191 = vector.broadcast %cst_71 : f32 to vector<16x32xf32>
    %192 = arith.addf %190, %191 : vector<16x32xf32>
    %193 = arith.mulf %192, %185 : vector<16x32xf32>
    %cst_72 = arith.constant -0.284496725 : f32
    %194 = vector.broadcast %cst_72 : f32 to vector<16x32xf32>
    %195 = arith.addf %193, %194 : vector<16x32xf32>
    %196 = arith.mulf %195, %185 : vector<16x32xf32>
    %cst_73 = arith.constant 0.254829586 : f32
    %197 = vector.broadcast %cst_73 : f32 to vector<16x32xf32>
    %198 = arith.addf %196, %197 : vector<16x32xf32>
    %199 = arith.mulf %198, %185 : vector<16x32xf32>
    %cst_74 = arith.constant 0.000000e+00 : f32
    %200 = vector.broadcast %cst_74 : f32 to vector<16x32xf32>
    %201 = arith.subf %200, %179 : vector<16x32xf32>
    %202 = arith.mulf %201, %179 : vector<16x32xf32>
    %203 = math.exp %202 : vector<16x32xf32>
    %204 = arith.mulf %199, %203 : vector<16x32xf32>
    %cst_75 = arith.constant 1.000000e+00 : f32
    %205 = vector.broadcast %cst_75 : f32 to vector<16x32xf32>
    %206 = arith.subf %205, %204 : vector<16x32xf32>
    %207 = arith.mulf %178, %206 : vector<16x32xf32>
    %cst_76 = arith.constant 1.000000e+00 : f32
    %208 = vector.broadcast %cst_76 : f32 to vector<16x32xf32>
    %209 = arith.addf %208, %207 : vector<16x32xf32>
    %210 = arith.mulf %171, %209 : vector<16x32xf32>
    %211 = arith.addf %210, %98 : vector<16x32xf32>
    %c0_77 = arith.constant 0 : index
    %c0_78 = arith.constant 0 : index
    %212 = vector.load %arg4[%c0_77, %c0_78] : memref<16x32xf32, #tpu.memory_space<vmem>>, vector<16x32xf32>
    tpu.vector_store %arg4[%c0_77, %c0_78], %211 {strides = array<i32>} : memref<16x32xf32, #tpu.memory_space<vmem>>, vector<16x32xf32>,
    return
  }
}

</mosaic_0001>

<llo_original>
// kernel: tpu_custom_call.1
$region0: #{tpu_custom_call.1}
  #allocation0 [shape = 'u32[]', space=smem, size = 0x4, offset = 0x4, fixed_abs, tag = 'smem constant byte address 0x4 - core index']
  #allocation1 [shape = 'u32[144,128]{1,0:T(1,128)}', space=vmem, size = 0x12000, scoped, tag = 'internal scratch']
  %s0 = inlined_call_operand.vmem [shape: f32[16,32], index: 0, kind: input, shape index: {}]
  %s1 = inlined_call_operand.vmem [shape: f32[32,192], index: 1, kind: input, shape index: {}]
  %s2 = inlined_call_operand.vmem [shape: f32[64,32], index: 2, kind: input, shape index: {}]
  %s3 = inlined_call_operand.vmem [shape: f32[8,96], index: 3, kind: input, shape index: {}]
  %s4 = inlined_call_operand.hbm [shape: f32[16,32], index: 4, kind: output, shape index: {}]
  %s5 = sld [smem:[#allocation0]]
  $region26: #{tpu_custom_call.1} parent=0
    _
  %s7 = ssub.s32 1, %s5
  %s8 = scalar_select 0, %s7, %s5
  $region1: #{tpu_custom_call.1} parent=0
    #allocation2 [shape = 'u8[8192]{0}', space=vmem, size = 0x2000, scoped, tag = 'output window, operand 0, single buffered']
    #allocation3 [shape = 's32[1]{0}', space=sflag, size = 0x4, scoped, tag = 'scoped memory for tpu_custom_call.1']
    %9 = vsyncpa [#allocation3], 0
    // Predicated region
    $region2: #{tpu_custom_call.1} parent=1 // pred_check
      _
    $region3: #{tpu_custom_call.1} parent=1 // pred_check_branch
      %11 = sbr.rel (0) target = $region5
    $region4: #{tpu_custom_call.1} parent=1 // pred_region
      _
    $region5: #{tpu_custom_call.1} parent=1 // pred_fallthru
      _
    // Predicated region
    $region6: #{tpu_custom_call.1} parent=1 // pred_check
      _
    $region7: #{tpu_custom_call.1} parent=1 // pred_check_branch
      %13 = sbr.rel (0) target = $region9
    $region8: #{tpu_custom_call.1} parent=1 // pred_region
      _
    $region9: #{tpu_custom_call.1} parent=1 // pred_fallthru
      _
    // Predicated region
    $region10: #{tpu_custom_call.1} parent=1 // pred_check
      _
    $region11: #{tpu_custom_call.1} parent=1 // pred_check_branch
      %15 = sbr.rel (0) target = $region13
    $region12: #{tpu_custom_call.1} parent=1 // pred_region
      _
    $region13: #{tpu_custom_call.1} parent=1 // pred_fallthru
      _
    // Predicated region
    $region14: #{tpu_custom_call.1} parent=1 // pred_check
      _
    $region15: #{tpu_custom_call.1} parent=1 // pred_check_branch
      %17 = sbr.rel (0) target = $region17
    $region16: #{tpu_custom_call.1} parent=1 // pred_region
      _
    $region17: #{tpu_custom_call.1} parent=1 // pred_fallthru
      _
    %v18 = vld [vmem:[%s0] sm:$0xff]
    %v19 = vld [vmem:[%s0 + $0x8] sm:$0xff]
    %v20 = vld [vmem:[%s3] sm:$0x1]
    %v21 = vld [vmem:[%s3 + $0x1] sm:$0x1]
    %v22 = vld [vmem:[%s3 + $0x2] sm:$0x1]
    %v23 = vld [vmem:[%s3 + $0x3] sm:$0x1]
    %v24 = vld [vmem:[%s3 + $0x4] sm:$0x1]
    %v25 = vld [vmem:[%s3 + $0x5] sm:$0x1]
    %v26 = vld [vmem:[%s3 + $0x6] sm:$0x1]
    %v27 = vld [vmem:[%s3 + $0x7] sm:$0x1]
    %v28 = vld [vmem:[%s1] sm:$0xff]
    %v29 = vld [vmem:[%s1 + $0x10] sm:$0xff]
    %v30 = vld [vmem:[%s1 + $0x20] sm:$0xff]
    %v31 = vld [vmem:[%s1 + $0x30] sm:$0xff]
    %v32 = vld [vmem:[%s1 + $0x8] sm:$0xff]
    %v33 = vld [vmem:[%s1 + $0x18] sm:$0xff]
    %v34 = vld [vmem:[%s1 + $0x28] sm:$0xff]
    %v35 = vld [vmem:[%s1 + $0x38] sm:$0xff]
    %v36 = vld [vmem:[%s2] sm:$0xff]
    %v37 = vld [vmem:[%s2 + $0x8] sm:$0xff]
    %v38 = vld [vmem:[%s2 + $0x10] sm:$0xff]
    %v39 = vld [vmem:[%s2 + $0x18] sm:$0xff]
    %v40 = vld [vmem:[%s2 + $0x20] sm:$0xff]
    %v41 = vld [vmem:[%s2 + $0x28] sm:$0xff]
    %v42 = vld [vmem:[%s2 + $0x30] sm:$0xff]
    %v43 = vld [vmem:[%s2 + $0x38] sm:$0xff]
    %vm44 = vcmask 261120
    %v45 = vsel %vm44, %v18, 0.0
    %46 = vadd.xlane.f32.xlu0 %v45
    %v47 = vpop.xlane.xlu0 %46
    %v48 = vsel %vm44, %v19, 0.0
    %49 = vadd.xlane.f32.xlu0 %v48
    %v50 = vpop.xlane.xlu0 %49
    %v51 = vrcp.pop 32.0
    %v52 = vmul.f32 %v47, %v51
    %v53 = vmul.f32 %v50, %v51
    %v54 = vsub.f32 %v18, %v52
    %v55 = vsub.f32 %v19, %v53
    %v56 = vmul.f32 %v54, %v54
    %v57 = vmul.f32 %v55, %v55
    %v58 = vsel %vm44, %v56, 0.0
    %59 = vadd.xlane.f32.xlu0 %v58
    %v60 = vpop.xlane.xlu0 %59
    %v61 = vsel %vm44, %v57, 0.0
    %62 = vadd.xlane.f32.xlu0 %v61
    %v63 = vpop.xlane.xlu0 %62
    %v64 = vmul.f32 %v60, %v51
    %v65 = vmul.f32 %v63, %v51
    %v66 = vadd.f32 %v64, 1e-05
    %v67 = vadd.f32 %v65, 1e-05
    %v68 = vrsqrt.pop %v66
    %v69 = vrsqrt.pop %v67
    %v70 = vmul.f32 %v54, %v68
    %v71 = vmul.f32 %v55, %v69
    %v72 = vlaneseq
    %v73 = vshrl.u32 %v72, 7
    %v74 = vsub.s32 0, %v73
    %v75 = vrot.slane %v20, %v74
    %v76 = vmul.f32 %v70, %v75
    %v77 = vmul.f32 %v71, %v75
    %v78 = vlaneseq
    %v79 = vshrl.u32 %v78, 7
    %v80 = vsub.s32 0, %v79
    %v81 = vrot.slane %v21, %v80
    %v82 = vadd.f32 %v76, %v81
    %v83 = vadd.f32 %v77, %v81
    %v84 = vlaneseq
    %v85 = vshrl.u32 %v84, 7
    %v86 = vsub.s32 0, %v85
    %v87 = vrot.slane %v22, %v86
    %v89 = vsel %vm44, %v82, 0
    %v92 = vsel %vm44, %v83, 0
    %94 = vmatprep.subr.mxu0 0.0
    %95 = vmatpush1.msra.mxu0 %v28
    %96 = vmatprep.subr.mxu0 0.0
    %97 = vmatpush1.msra.mxu0 %v29
    %98 = vmatprep.subr.mxu0 0.0
    %99 = vmatpush1.msra.mxu0 %v30
    %100 = vmatprep.subr.mxu0 0.0
    %101 = vmatpush1.msra.mxu0 %v31
    %102 = vmatprep.subr.mxu0 0.0
    %103 = vmatpush1.msra.mxu0 0.0
    %104 = vmatprep.subr.mxu0 0.0
    %105 = vmatpush1.msra.mxu0 0.0
    %106 = vmatprep.subr.mxu0 0.0
    %107 = vmatpush1.msra.mxu0 0.0
    %108 = vmatprep.subr.mxu0 0.0
    %109 = vmatpush1.msra.mxu0 0.0
    %110 = vmatprep.subr.mxu0 0.0
    %111 = vmatpush1.msra.mxu0 0.0
    %112 = vmatprep.subr.mxu0 0.0
    %113 = vmatpush1.msra.mxu0 0.0
    %114 = vmatprep.subr.mxu0 0.0
    %115 = vmatpush1.msra.mxu0 0.0
    %116 = vmatprep.subr.mxu0 0.0
    %117 = vmatpush1.msra.mxu0 0.0
    %118 = vmatprep.subr.mxu0 0.0
    %119 = vmatpush1.msra.mxu0 0.0
    %120 = vmatprep.subr.mxu0 0.0
    %121 = vmatpush1.msra.mxu0 0.0
    %122 = vmatprep.subr.mxu0 0.0
    %123 = vmatpush1.msra.mxu0 0.0
    %124 = vmatprep.subr.mxu0 0.0
    %125 = vmatpush1.msra.mxu0 0.0
    %126 = vmatprep.subr.mxu0 0.0
    %127 = vmatpush1.msra.mxu0 0.0
    %128 = vmatprep.subr.mxu0 0.0
    %129 = vmatpush1.msra.mxu0 0.0
    %130 = vmatprep.subr.mxu0 0.0
    %131 = vmatpush1.msra.mxu0 0.0
    %132 = vmatprep.subr.mxu0 0.0
    %133 = vmatpush1.msra.mxu0 0.0
    %134 = vmatprep.subr.mxu0 0.0
    %135 = vmatpush1.msra.mxu0 0.0
    %136 = vmatprep.subr.mxu0 0.0
    %137 = vmatpush1.msra.mxu0 0.0
    %138 = vmatprep.subr.mxu0 0.0
    %139 = vmatpush1.msra.mxu0 0.0
    %140 = vmatprep.subr.mxu0 0.0
    %141 = vmatpush1.msra.mxu0 0.0
    %142 = vmatprep.subr.mxu0 0.0
    %143 = vmatpush1.msra.mxu0 0.0
    %144 = vmatprep.subr.mxu0 0.0
    %145 = vmatpush1.msra.mxu0 0.0
    %146 = vmatprep.subr.mxu0 0.0
    %147 = vmatpush1.msra.mxu0 0.0
    %148 = vmatprep.subr.mxu0 0.0
    %149 = vmatpush1.msra.mxu0 0.0
    %150 = vmatprep.subr.mxu0 0.0
    %151 = vmatpush1.msra.mxu0 0.0
    %152 = vmatprep.subr.mxu0 0.0
    %153 = vmatpush1.msra.mxu0 0.0
    %154 = vmatprep.subr.mxu0 0.0
    %155 = vmatpush1.msra.mxu0 0.0
    %156 = vmatprep.subr.mxu0 0.0
    %157 = vmatpush1.msra.mxu0 0.0
    %158 = vmatprep.mubr.f32.mxu0 0.0
    %159 = vmatmul.mubr.f32.gmra.mrb[0].mxu0 %v89
    %v160 = vpop.f32.mrb[0].mxu0
    %v161 = vadd.f32 %v87, %v160
    %v162 = vpop.f32.mrb[0].mxu0
    %163 = vmatprep.mubr.f32.mxu0 0.0
    %164 = vmatmul.mubr.f32.gmra.mrb[0].mxu0 %v92
    %v165 = vpop.f32.mrb[0].mxu0
    %v166 = vadd.f32 %v87, %v165
    %v167 = vpop.f32.mrb[0].mxu0
    %168 = vdwg.mxu0
    %v169 = vlaneseq
    %v170 = vshrl.u32 %v169, 7
    %v171 = vadd.s32 %v170, 8
    %v172 = vadd.s32 %v170, 16
    %v173 = vadd.s32 %v170, 24
    %v174 = vadd.s32 %v170, 32
    %v175 = vadd.s32 %v170, 40
    %v176 = vadd.s32 %v170, 48
    %v177 = vadd.s32 %v170, 56
    %v178 = vadd.s32 %v170, 64
    %v179 = vadd.s32 %v170, 72
    %v180 = vadd.s32 %v170, 80
    %v181 = vadd.s32 %v170, 88
    %v182 = vadd.s32 %v170, 96
    %v183 = vadd.s32 %v170, 104
    %v184 = vadd.s32 %v170, 112
    %v185 = vadd.s32 %v170, 120
    %v186 = vlaneseq
    %v187 = vand.u32 %v186, 127
    %v188 = vand.u32 %v170, 15
    %v189 = vand.u32 %v171, 15
    %v190 = vand.u32 %v172, 15
    %v191 = vand.u32 %v173, 15
    %v192 = vand.u32 %v174, 15
    %v193 = vand.u32 %v175, 15
    %v194 = vand.u32 %v176, 15
    %v195 = vand.u32 %v177, 15
    %v196 = vand.u32 %v178, 15
    %v197 = vand.u32 %v179, 15
    %v198 = vand.u32 %v180, 15
    %v199 = vand.u32 %v181, 15
    %v200 = vand.u32 %v182, 15
    %v201 = vand.u32 %v183, 15
    %v202 = vand.u32 %v184, 15
    %v203 = vand.u32 %v185, 15
    %vm204 = vcmp.eq.s32.totalorder %v188, %v187
    %vm205 = vcmp.eq.s32.totalorder %v189, %v187
    %vm206 = vcmp.eq.s32.totalorder %v190, %v187
    %vm207 = vcmp.eq.s32.totalorder %v191, %v187
    %vm208 = vcmp.eq.s32.totalorder %v192, %v187
    %vm209 = vcmp.eq.s32.totalorder %v193, %v187
    %vm210 = vcmp.eq.s32.totalorder %v194, %v187
    %vm211 = vcmp.eq.s32.totalorder %v195, %v187
    %vm212 = vcmp.eq.s32.totalorder %v196, %v187
    %vm213 = vcmp.eq.s32.totalorder %v197, %v187
    %vm214 = vcmp.eq.s32.totalorder %v198, %v187
    %vm215 = vcmp.eq.s32.totalorder %v199, %v187
    %vm216 = vcmp.eq.s32.totalorder %v200, %v187
    %vm217 = vcmp.eq.s32.totalorder %v201, %v187
    %vm218 = vcmp.eq.s32.totalorder %v202, %v187
    %vm219 = vcmp.eq.s32.totalorder %v203, %v187
    %v220 = vsel %vm204, 1.0, 0.0
    %v221 = vsel %vm205, 1.0, 0.0
    %v222 = vsel %vm206, 1.0, 0.0
    %v223 = vsel %vm207, 1.0, 0.0
    %v224 = vsel %vm208, 1.0, 0.0
    %v225 = vsel %vm209, 1.0, 0.0
    %v226 = vsel %vm210, 1.0, 0.0
    %v227 = vsel %vm211, 1.0, 0.0
    %v228 = vsel %vm212, 1.0, 0.0
    %v229 = vsel %vm213, 1.0, 0.0
    %v230 = vsel %vm214, 1.0, 0.0
    %v231 = vsel %vm215, 1.0, 0.0
    %v232 = vsel %vm216, 1.0, 0.0
    %v233 = vsel %vm217, 1.0, 0.0
    %v234 = vsel %vm218, 1.0, 0.0
    %v235 = vsel %vm219, 1.0, 0.0
    %v236 = vshra.s32 %v188, 3
    %v237 = vshra.s32 %v189, 3
    %v238 = vshra.s32 %v190, 3
    %v239 = vshra.s32 %v191, 3
    %v240 = vshra.s32 %v192, 3
    %v241 = vshra.s32 %v193, 3
    %v242 = vshra.s32 %v194, 3
    %v243 = vshra.s32 %v195, 3
    %v244 = vshra.s32 %v196, 3
    %v245 = vshra.s32 %v197, 3
    %v246 = vshra.s32 %v198, 3
    %v247 = vshra.s32 %v199, 3
    %v248 = vshra.s32 %v200, 3
    %v249 = vshra.s32 %v201, 3
    %v250 = vshra.s32 %v202, 3
    %v251 = vshra.s32 %v203, 3
    %v252 = vshra.s32 %v187, 3
    %vm253 = vcmp.eq.s32.totalorder %v236, %v252
    %vm254 = vcmp.eq.s32.totalorder %v237, %v252
    %vm255 = vcmp.eq.s32.totalorder %v238, %v252
    %vm256 = vcmp.eq.s32.totalorder %v239, %v252
    %vm257 = vcmp.eq.s32.totalorder %v240, %v252
    %vm258 = vcmp.eq.s32.totalorder %v241, %v252
    %vm259 = vcmp.eq.s32.totalorder %v242, %v252
    %vm260 = vcmp.eq.s32.totalorder %v243, %v252
    %vm261 = vcmp.eq.s32.totalorder %v244, %v252
    %vm262 = vcmp.eq.s32.totalorder %v245, %v252
    %vm263 = vcmp.eq.s32.totalorder %v246, %v252
    %vm264 = vcmp.eq.s32.totalorder %v247, %v252
    %vm265 = vcmp.eq.s32.totalorder %v248, %v252
    %vm266 = vcmp.eq.s32.totalorder %v249, %v252
    %vm267 = vcmp.eq.s32.totalorder %v250, %v252
    %vm268 = vcmp.eq.s32.totalorder %v251, %v252
    %v269 = vshra.s32 %v187, 2
    %v270 = vshra.s32 %v170, 4
    %v271 = vshra.s32 %v171, 4
    %v272 = vshra.s32 %v172, 4
    %v273 = vshra.s32 %v173, 4
    %v274 = vshra.s32 %v174, 4
    %v275 = vshra.s32 %v175, 4
    %v276 = vshra.s32 %v176, 4
    %v277 = vshra.s32 %v177, 4
    %v278 = vshra.s32 %v178, 4
    %v279 = vshra.s32 %v179, 4
    %v280 = vshra.s32 %v180, 4
    %v281 = vshra.s32 %v181, 4
    %v282 = vshra.s32 %v182, 4
    %v283 = vshra.s32 %v183, 4
    %v284 = vshra.s32 %v184, 4
    %v285 = vshra.s32 %v185, 4
    %vm286 = vcmp.eq.s32.totalorder %v269, %v270
    %vm287 = vcmp.eq.s32.totalorder %v269, %v271
    %vm288 = vcmp.eq.s32.totalorder %v269, %v272
    %vm289 = vcmp.eq.s32.totalorder %v269, %v273
    %vm290 = vcmp.eq.s32.totalorder %v269, %v274
    %vm291 = vcmp.eq.s32.totalorder %v269, %v275
    %vm292 = vcmp.eq.s32.totalorder %v269, %v276
    %vm293 = vcmp.eq.s32.totalorder %v269, %v277
    %vm294 = vcmp.eq.s32.totalorder %v269, %v278
    %vm295 = vcmp.eq.s32.totalorder %v269, %v279
    %vm296 = vcmp.eq.s32.totalorder %v269, %v280
    %vm297 = vcmp.eq.s32.totalorder %v269, %v281
    %vm298 = vcmp.eq.s32.totalorder %v269, %v282
    %vm299 = vcmp.eq.s32.totalorder %v269, %v283
    %vm300 = vcmp.eq.s32.totalorder %v269, %v284
    %vm301 = vcmp.eq.s32.totalorder %v269, %v285
    %v302 = vsel %vm286, 1.0, 0.0
    %v303 = vsel %vm287, 1.0, 0.0
    %v304 = vsel %vm288, 1.0, 0.0
    %v305 = vsel %vm289, 1.0, 0.0
    %v306 = vsel %vm290, 1.0, 0.0
    %v307 = vsel %vm291, 1.0, 0.0
    %v308 = vsel %vm292, 1.0, 0.0
    %v309 = vsel %vm293, 1.0, 0.0
    %v310 = vsel %vm294, 1.0, 0.0
    %v311 = vsel %vm295, 1.0, 0.0
    %v312 = vsel %vm296, 1.0, 0.0
    %v313 = vsel %vm297, 1.0, 0.0
    %v314 = vsel %vm298, 1.0, 0.0
    %v315 = vsel %vm299, 1.0, 0.0
    %v316 = vsel %vm300, 1.0, 0.0
    %v317 = vsel %vm301, 1.0, 0.0
    %v318 = vand.u32 %v187, 15
    %vm319 = vcmp.eq.s32.totalorder %v318, %v170
    %vm320 = vcmp.eq.s32.totalorder %v318, %v171
    %v321 = vsel %vm319, 1.0, 0.0
    %v322 = vsel %vm320, 1.0, 0.0
    %vm323 = vcmask 130048
    %v325 = vsel %vm323, %v220, 0
    %v328 = vsel %vm323, %v221, 0
    %v331 = vsel %vm323, %v222, 0
    %v334 = vsel %vm323, %v223, 0
    %v337 = vsel %vm323, %v224, 0
    %v340 = vsel %vm323, %v225, 0
    %v343 = vsel %vm323, %v226, 0
    %v346 = vsel %vm323, %v227, 0
    %v349 = vsel %vm323, %v228, 0
    %v352 = vsel %vm323, %v229, 0
    %v355 = vsel %vm323, %v230, 0
    %v358 = vsel %vm323, %v231, 0
    %v361 = vsel %vm323, %v232, 0
    %v364 = vsel %vm323, %v233, 0
    %v367 = vsel %vm323, %v234, 0
    %v370 = vsel %vm323, %v235, 0
    %372 = vmatprep.subr.mxu0 0.0
    %373 = vmatpush1.msra.mxu0 %v161
    %374 = vmatprep.subr.mxu0 0.0
    %375 = vmatpush1.msra.mxu0 %v166
    %376 = vmatprep.subr.mxu0 0.0
    %377 = vmatpush1.msra.mxu0 0.0
    %378 = vmatprep.subr.mxu0 0.0
    %379 = vmatpush1.msra.mxu0 0.0
    %380 = vmatprep.subr.mxu0 0.0
    %381 = vmatpush1.msra.mxu0 0.0
    %382 = vmatprep.subr.mxu0 0.0
    %383 = vmatpush1.msra.mxu0 0.0
    %384 = vmatprep.subr.mxu0 0.0
    %385 = vmatpush1.msra.mxu0 0.0
    %386 = vmatprep.subr.mxu0 0.0
    %387 = vmatpush1.msra.mxu0 0.0
    %388 = vmatprep.subr.mxu0 0.0
    %389 = vmatpush1.msra.mxu0 0.0
    %390 = vmatprep.subr.mxu0 0.0
    %391 = vmatpush1.msra.mxu0 0.0
    %392 = vmatprep.subr.mxu0 0.0
    %393 = vmatpush1.msra.mxu0 0.0
    %394 = vmatprep.subr.mxu0 0.0
    %395 = vmatpush1.msra.mxu0 0.0
    %396 = vmatprep.subr.mxu0 0.0
    %397 = vmatpush1.msra.mxu0 0.0
    %398 = vmatprep.subr.mxu0 0.0
    %399 = vmatpush1.msra.mxu0 0.0
    %400 = vmatprep.subr.mxu0 0.0
    %401 = vmatpush1.msra.mxu0 0.0
    %402 = vmatprep.subr.mxu0 0.0
    %403 = vmatpush1.msra.mxu0 0.0
    %404 = vmatprep.subr.mxu0 0.0
    %405 = vmatpush1.msra.mxu0 0.0
    %406 = vmatprep.subr.mxu0 0.0
    %407 = vmatpush1.msra.mxu0 0.0
    %408 = vmatprep.subr.mxu0 0.0
    %409 = vmatpush1.msra.mxu0 0.0
    %410 = vmatprep.subr.mxu0 0.0
    %411 = vmatpush1.msra.mxu0 0.0
    %412 = vmatprep.subr.mxu0 0.0
    %413 = vmatpush1.msra.mxu0 0.0
    %414 = vmatprep.subr.mxu0 0.0
    %415 = vmatpush1.msra.mxu0 0.0
    %416 = vmatprep.subr.mxu0 0.0
    %417 = vmatpush1.msra.mxu0 0.0
    %418 = vmatprep.subr.mxu0 0.0
    %419 = vmatpush1.msra.mxu0 0.0
    %420 = vmatprep.subr.mxu0 0.0
    %421 = vmatpush1.msra.mxu0 0.0
    %422 = vmatprep.subr.mxu0 0.0
    %423 = vmatpush1.msra.mxu0 0.0
    %424 = vmatprep.subr.mxu0 0.0
    %425 = vmatpush1.msra.mxu0 0.0
    %426 = vmatprep.subr.mxu0 0.0
    %427 = vmatpush1.msra.mxu0 0.0
    %428 = vmatprep.subr.mxu0 0.0
    %429 = vmatpush1.msra.mxu0 0.0
    %430 = vmatprep.subr.mxu0 0.0
    %431 = vmatpush1.msra.mxu0 0.0
    %432 = vmatprep.subr.mxu0 0.0
    %433 = vmatpush1.msra.mxu0 0.0
    %434 = vmatprep.subr.mxu0 0.0
    %435 = vmatpush1.msra.mxu0 0.0
    %436 = vmatprep.mubr.f32.mxu0 0.0
    %437 = vmatmul.mubr.f32.gmra.mrb[0].mxu0 %v325
    %v438 = vpop.f32.mrb[0].mxu0
    %v439 = vadd.f32 0.0, %v438
    %v440 = vpop.f32.mrb[0].mxu0
    %441 = vmatprep.mubr.f32.mxu0 0.0
    %442 = vmatmul.mubr.f32.gmra.mrb[0].mxu0 %v328
    %v443 = vpop.f32.mrb[0].mxu0
    %v444 = vadd.f32 0.0, %v443
    %v445 = vpop.f32.mrb[0].mxu0
    %446 = vmatprep.mubr.f32.mxu0 0.0
    %447 = vmatmul.mubr.f32.gmra.mrb[0].mxu0 %v331
    %v448 = vpop.f32.mrb[0].mxu0
    %v449 = vadd.f32 0.0, %v448
    %v450 = vpop.f32.mrb[0].mxu0
    %451 = vmatprep.mubr.f32.mxu0 0.0
    %452 = vmatmul.mubr.f32.gmra.mrb[0].mxu0 %v334
    %v453 = vpop.f32.mrb[0].mxu0
    %v454 = vadd.f32 0.0, %v453
    %v455 = vpop.f32.mrb[0].mxu0
    %456 = vmatprep.mubr.f32.mxu0 0.0
    %457 = vmatmul.mubr.f32.gmra.mrb[0].mxu0 %v337
    %v458 = vpop.f32.mrb[0].mxu0
    %v459 = vadd.f32 0.0, %v458
    %v460 = vpop.f32.mrb[0].mxu0
    %461 = vmatprep.mubr.f32.mxu0 0.0
    %462 = vmatmul.mubr.f32.gmra.mrb[0].mxu0 %v340
    %v463 = vpop.f32.mrb[0].mxu0
    %v464 = vadd.f32 0.0, %v463
    %v465 = vpop.f32.mrb[0].mxu0
    %466 = vmatprep.mubr.f32.mxu0 0.0
    %467 = vmatmul.mubr.f32.gmra.mrb[0].mxu0 %v343
    %v468 = vpop.f32.mrb[0].mxu0
    %v469 = vadd.f32 0.0, %v468
    %v470 = vpop.f32.mrb[0].mxu0
    %471 = vmatprep.mubr.f32.mxu0 0.0
    %472 = vmatmul.mubr.f32.gmra.mrb[0].mxu0 %v346
    %v473 = vpop.f32.mrb[0].mxu0
    %v474 = vadd.f32 0.0, %v473
    %v475 = vpop.f32.mrb[0].mxu0
    %476 = vmatprep.mubr.f32.mxu0 0.0
    %477 = vmatmul.mubr.f32.gmra.mrb[0].mxu0 %v349
    %v478 = vpop.f32.mrb[0].mxu0
    %v479 = vadd.f32 0.0, %v478
    %v480 = vpop.f32.mrb[0].mxu0
    %481 = vmatprep.mubr.f32.mxu0 0.0
    %482 = vmatmul.mubr.f32.gmra.mrb[0].mxu0 %v352
    %v483 = vpop.f32.mrb[0].mxu0
    %v484 = vadd.f32 0.0, %v483
    %v485 = vpop.f32.mrb[0].mxu0
    %486 = vmatprep.mubr.f32.mxu0 0.0
    %487 = vmatmul.mubr.f32.gmra.mrb[0].mxu0 %v355
    %v488 = vpop.f32.mrb[0].mxu0
    %v489 = vadd.f32 0.0, %v488
    %v490 = vpop.f32.mrb[0].mxu0
    %491 = vmatprep.mubr.f32.mxu0 0.0
    %492 = vmatmul.mubr.f32.gmra.mrb[0].mxu0 %v358
    %v493 = vpop.f32.mrb[0].mxu0
    %v494 = vadd.f32 0.0, %v493
    %v495 = vpop.f32.mrb[0].mxu0
    %496 = vmatprep.mubr.f32.mxu0 0.0
    %497 = vmatmul.mubr.f32.gmra.mrb[0].mxu0 %v361
    %v498 = vpop.f32.mrb[0].mxu0
    %v499 = vadd.f32 0.0, %v498
    %v500 = vpop.f32.mrb[0].mxu0
    %501 = vmatprep.mubr.f32.mxu0 0.0
    %502 = vmatmul.mubr.f32.gmra.mrb[0].mxu0 %v364
    %v503 = vpop.f32.mrb[0].mxu0
    %v504 = vadd.f32 0.0, %v503
    %v505 = vpop.f32.mrb[0].mxu0
    %506 = vmatprep.mubr.f32.mxu0 0.0
    %507 = vmatmul.mubr.f32.gmra.mrb[0].mxu0 %v367
    %v508 = vpop.f32.mrb[0].mxu0
    %v509 = vadd.f32 0.0, %v508
    %v510 = vpop.f32.mrb[0].mxu0
    %511 = vmatprep.mubr.f32.mxu0 0.0
    %512 = vmatmul.mubr.f32.gmra.mrb[0].mxu0 %v370
    %v513 = vpop.f32.mrb[0].mxu0
    %v514 = vadd.f32 0.0, %v513
    %v515 = vpop.f32.mrb[0].mxu0
    %516 = vdwg.mxu0
    %v517 = vmul.f32 %v439, %v302
    %v518 = vmul.f32 %v444, %v303
    %v519 = vmul.f32 %v449, %v304
    %v520 = vmul.f32 %v454, %v305
    %v521 = vmul.f32 %v459, %v306
    %v522 = vmul.f32 %v464, %v307
    %v523 = vmul.f32 %v469, %v308
    %v524 = vmul.f32 %v474, %v309
    %v525 = vmul.f32 %v479, %v310
    %v526 = vmul.f32 %v484, %v311
    %v527 = vmul.f32 %v489, %v312
    %v528 = vmul.f32 %v494, %v313
    %v529 = vmul.f32 %v499, %v314
    %v530 = vmul.f32 %v504, %v315
    %v531 = vmul.f32 %v509, %v316
    %v532 = vmul.f32 %v514, %v317
    %535 = vrot.lane.b32.xlu0 %v161, 96
    %v536 = vpop.permute.xlu0 %535
    %537 = vrot.lane.b32.xlu0 %v166, 96
    %v538 = vpop.permute.xlu0 %537
    %v540 = vsel %vm44, %v517, 0
    %v543 = vsel %vm44, %v518, 0
    %v546 = vsel %vm44, %v519, 0
    %v549 = vsel %vm44, %v520, 0
    %v552 = vsel %vm44, %v521, 0
    %v555 = vsel %vm44, %v522, 0
    %v558 = vsel %vm44, %v523, 0
    %v561 = vsel %vm44, %v524, 0
    %v564 = vsel %vm44, %v525, 0
    %v567 = vsel %vm44, %v526, 0
    %v570 = vsel %vm44, %v527, 0
    %v573 = vsel %vm44, %v528, 0
    %v576 = vsel %vm44, %v529, 0
    %v579 = vsel %vm44, %v530, 0
    %v582 = vsel %vm44, %v531, 0
    %v585 = vsel %vm44, %v532, 0
    %v587 = vsel %vm44, %v536, 0
    %v589 = vsel %vm44, %v538, 0
    %591 = vmatprep.subr.mxu0 0.0
    %592 = vmatpush1.xpose.msra.mxu0 %v587
    %593 = vmatprep.subr.mxu0 0.0
    %594 = vmatpush1.xpose.msra.mxu0 %v589
    %595 = vmatprep.subr.mxu0 0.0
    %596 = vmatpush1.xpose.msra.mxu0 0.0
    %597 = vmatprep.subr.mxu0 0.0
    %598 = vmatpush1.xpose.msra.mxu0 0.0
    %599 = vmatprep.subr.mxu0 0.0
    %600 = vmatpush1.xpose.msra.mxu0 0.0
    %601 = vmatprep.subr.mxu0 0.0
    %602 = vmatpush1.xpose.msra.mxu0 0.0
    %603 = vmatprep.subr.mxu0 0.0
    %604 = vmatpush1.xpose.msra.mxu0 0.0
    %605 = vmatprep.subr.mxu0 0.0
    %606 = vmatpush1.xpose.msra.mxu0 0.0
    %607 = vmatprep.subr.mxu0 0.0
    %608 = vmatpush1.xpose.msra.mxu0 0.0
    %609 = vmatprep.subr.mxu0 0.0
    %610 = vmatpush1.xpose.msra.mxu0 0.0
    %611 = vmatprep.subr.mxu0 0.0
    %612 = vmatpush1.xpose.msra.mxu0 0.0
    %613 = vmatprep.subr.mxu0 0.0
    %614 = vmatpush1.xpose.msra.mxu0 0.0
    %615 = vmatprep.subr.mxu0 0.0
    %616 = vmatpush1.xpose.msra.mxu0 0.0
    %617 = vmatprep.subr.mxu0 0.0
    %618 = vmatpush1.xpose.msra.mxu0 0.0
    %619 = vmatprep.subr.mxu0 0.0
    %620 = vmatpush1.xpose.msra.mxu0 0.0
    %621 = vmatprep.subr.mxu0 0.0
    %622 = vmatpush1.xpose.msra.mxu0 0.0
    %623 = vmatprep.subr.mxu0 0.0
    %624 = vmatpush1.xpose.msra.mxu0 0.0
    %625 = vmatprep.subr.mxu0 0.0
    %626 = vmatpush1.xpose.msra.mxu0 0.0
    %627 = vmatprep.subr.mxu0 0.0
    %628 = vmatpush1.xpose.msra.mxu0 0.0
    %629 = vmatprep.subr.mxu0 0.0
    %630 = vmatpush1.xpose.msra.mxu0 0.0
    %631 = vmatprep.subr.mxu0 0.0
    %632 = vmatpush1.xpose.msra.mxu0 0.0
    %633 = vmatprep.subr.mxu0 0.0
    %634 = vmatpush1.xpose.msra.mxu0 0.0
    %635 = vmatprep.subr.mxu0 0.0
    %636 = vmatpush1.xpose.msra.mxu0 0.0
    %637 = vmatprep.subr.mxu0 0.0
    %638 = vmatpush1.xpose.msra.mxu0 0.0
    %639 = vmatprep.subr.mxu0 0.0
    %640 = vmatpush1.xpose.msra.mxu0 0.0
    %641 = vmatprep.subr.mxu0 0.0
    %642 = vmatpush1.xpose.msra.mxu0 0.0
    %643 = vmatprep.subr.mxu0 0.0
    %644 = vmatpush1.xpose.msra.mxu0 0.0
    %645 = vmatprep.subr.mxu0 0.0
    %646 = vmatpush1.xpose.msra.mxu0 0.0
    %647 = vmatprep.subr.mxu0 0.0
    %648 = vmatpush1.xpose.msra.mxu0 0.0
    %649 = vmatprep.subr.mxu0 0.0
    %650 = vmatpush1.xpose.msra.mxu0 0.0
    %651 = vmatprep.subr.mxu0 0.0
    %652 = vmatpush1.xpose.msra.mxu0 0.0
    %653 = vmatprep.subr.mxu0 0.0
    %654 = vmatpush1.xpose.msra.mxu0 0.0
    %655 = vmatprep.mubr.f32.mxu0 0.0
    %656 = vmatmul.mubr.f32.gmra.mrb[0].mxu0 %v540
    %v657 = vpop.f32.mrb[0].mxu0
    %v658 = vadd.f32 0.0, %v657
    %v659 = vpop.f32.mrb[0].mxu0
    %660 = vmatprep.mubr.f32.mxu0 0.0
    %661 = vmatmul.mubr.f32.gmra.mrb[0].mxu0 %v543
    %v662 = vpop.f32.mrb[0].mxu0
    %v663 = vadd.f32 0.0, %v662
    %v664 = vpop.f32.mrb[0].mxu0
    %665 = vmatprep.mubr.f32.mxu0 0.0
    %666 = vmatmul.mubr.f32.gmra.mrb[0].mxu0 %v546
    %v667 = vpop.f32.mrb[0].mxu0
    %v668 = vadd.f32 0.0, %v667
    %v669 = vpop.f32.mrb[0].mxu0
    %670 = vmatprep.mubr.f32.mxu0 0.0
    %671 = vmatmul.mubr.f32.gmra.mrb[0].mxu0 %v549
    %v672 = vpop.f32.mrb[0].mxu0
    %v673 = vadd.f32 0.0, %v672
    %v674 = vpop.f32.mrb[0].mxu0
    %675 = vmatprep.mubr.f32.mxu0 0.0
    %676 = vmatmul.mubr.f32.gmra.mrb[0].mxu0 %v552
    %v677 = vpop.f32.mrb[0].mxu0
    %v678 = vadd.f32 0.0, %v677
    %v679 = vpop.f32.mrb[0].mxu0
    %680 = vmatprep.mubr.f32.mxu0 0.0
    %681 = vmatmul.mubr.f32.gmra.mrb[0].mxu0 %v555
    %v682 = vpop.f32.mrb[0].mxu0
    %v683 = vadd.f32 0.0, %v682
    %v684 = vpop.f32.mrb[0].mxu0
    %685 = vmatprep.mubr.f32.mxu0 0.0
    %686 = vmatmul.mubr.f32.gmra.mrb[0].mxu0 %v558
    %v687 = vpop.f32.mrb[0].mxu0
    %v688 = vadd.f32 0.0, %v687
    %v689 = vpop.f32.mrb[0].mxu0
    %690 = vmatprep.mubr.f32.mxu0 0.0
    %691 = vmatmul.mubr.f32.gmra.mrb[0].mxu0 %v561
    %v692 = vpop.f32.mrb[0].mxu0
    %v693 = vadd.f32 0.0, %v692
    %v694 = vpop.f32.mrb[0].mxu0
    %695 = vmatprep.mubr.f32.mxu0 0.0
    %696 = vmatmul.mubr.f32.gmra.mrb[0].mxu0 %v564
    %v697 = vpop.f32.mrb[0].mxu0
    %v698 = vadd.f32 0.0, %v697
    %v699 = vpop.f32.mrb[0].mxu0
    %700 = vmatprep.mubr.f32.mxu0 0.0
    %701 = vmatmul.mubr.f32.gmra.mrb[0].mxu0 %v567
    %v702 = vpop.f32.mrb[0].mxu0
    %v703 = vadd.f32 0.0, %v702
    %v704 = vpop.f32.mrb[0].mxu0
    %705 = vmatprep.mubr.f32.mxu0 0.0
    %706 = vmatmul.mubr.f32.gmra.mrb[0].mxu0 %v570
    %v707 = vpop.f32.mrb[0].mxu0
    %v708 = vadd.f32 0.0, %v707
    %v709 = vpop.f32.mrb[0].mxu0
    %710 = vmatprep.mubr.f32.mxu0 0.0
    %711 = vmatmul.mubr.f32.gmra.mrb[0].mxu0 %v573
    %v712 = vpop.f32.mrb[0].mxu0
    %v713 = vadd.f32 0.0, %v712
    %v714 = vpop.f32.mrb[0].mxu0
    %715 = vmatprep.mubr.f32.mxu0 0.0
    %716 = vmatmul.mubr.f32.gmra.mrb[0].mxu0 %v576
    %v717 = vpop.f32.mrb[0].mxu0
    %v718 = vadd.f32 0.0, %v717
    %v719 = vpop.f32.mrb[0].mxu0
    %720 = vmatprep.mubr.f32.mxu0 0.0
    %721 = vmatmul.mubr.f32.gmra.mrb[0].mxu0 %v579
    %v722 = vpop.f32.mrb[0].mxu0
    %v723 = vadd.f32 0.0, %v722
    %v724 = vpop.f32.mrb[0].mxu0
    %725 = vmatprep.mubr.f32.mxu0 0.0
    %726 = vmatmul.mubr.f32.gmra.mrb[0].mxu0 %v582
    %v727 = vpop.f32.mrb[0].mxu0
    %v728 = vadd.f32 0.0, %v727
    %v729 = vpop.f32.mrb[0].mxu0
    %730 = vmatprep.mubr.f32.mxu0 0.0
    %731 = vmatmul.mubr.f32.gmra.mrb[0].mxu0 %v585
    %v732 = vpop.f32.mrb[0].mxu0
    %v733 = vadd.f32 0.0, %v732
    %v734 = vpop.f32.mrb[0].mxu0
    %735 = vdwg.mxu0
    %v736 = vmul.f32 %v658, 0.17677669
    %v737 = vmul.f32 %v663, 0.17677669
    %v738 = vmul.f32 %v668, 0.17677669
    %v739 = vmul.f32 %v673, 0.17677669
    %v740 = vmul.f32 %v678, 0.17677669
    %v741 = vmul.f32 %v683, 0.17677669
    %v742 = vmul.f32 %v688, 0.17677669
    %v743 = vmul.f32 %v693, 0.17677669
    %v744 = vmul.f32 %v698, 0.17677669
    %v745 = vmul.f32 %v703, 0.17677669
    %v746 = vmul.f32 %v708, 0.17677669
    %v747 = vmul.f32 %v713, 0.17677669
    %v748 = vmul.f32 %v718, 0.17677669
    %v749 = vmul.f32 %v723, 0.17677669
    %v750 = vmul.f32 %v728, 0.17677669
    %v751 = vmul.f32 %v733, 0.17677669
    %v752 = vsel %vm253, %v736, -1e+30
    %v753 = vsel %vm254, %v737, -1e+30
    %v754 = vsel %vm255, %v738, -1e+30
    %v755 = vsel %vm256, %v739, -1e+30
    %v756 = vsel %vm257, %v740, -1e+30
    %v757 = vsel %vm258, %v741, -1e+30
    %v758 = vsel %vm259, %v742, -1e+30
    %v759 = vsel %vm260, %v743, -1e+30
    %v760 = vsel %vm261, %v744, -1e+30
    %v761 = vsel %vm262, %v745, -1e+30
    %v762 = vsel %vm263, %v746, -1e+30
    %v763 = vsel %vm264, %v747, -1e+30
    %v764 = vsel %vm265, %v748, -1e+30
    %v765 = vsel %vm266, %v749, -1e+30
    %v766 = vsel %vm267, %v750, -1e+30
    %v767 = vsel %vm268, %v751, -1e+30
    %v768 = vsel %vm323, %v752, -inf
    %769 = vmax.xlane.f32.xlu0 %v768
    %v770 = vpop.xlane.xlu0 %769
    %v771 = vsel %vm323, %v753, -inf
    %772 = vmax.xlane.f32.xlu0 %v771
    %v773 = vpop.xlane.xlu0 %772
    %v774 = vsel %vm323, %v754, -inf
    %775 = vmax.xlane.f32.xlu0 %v774
    %v776 = vpop.xlane.xlu0 %775
    %v777 = vsel %vm323, %v755, -inf
    %778 = vmax.xlane.f32.xlu0 %v777
    %v779 = vpop.xlane.xlu0 %778
    %v780 = vsel %vm323, %v756, -inf
    %781 = vmax.xlane.f32.xlu0 %v780
    %v782 = vpop.xlane.xlu0 %781
    %v783 = vsel %vm323, %v757, -inf
    %784 = vmax.xlane.f32.xlu0 %v783
    %v785 = vpop.xlane.xlu0 %784
    %v786 = vsel %vm323, %v758, -inf
    %787 = vmax.xlane.f32.xlu0 %v786
    %v788 = vpop.xlane.xlu0 %787
    %v789 = vsel %vm323, %v759, -inf
    %790 = vmax.xlane.f32.xlu0 %v789
    %v791 = vpop.xlane.xlu0 %790
    %v792 = vsel %vm323, %v760, -inf
    %793 = vmax.xlane.f32.xlu0 %v792
    %v794 = vpop.xlane.xlu0 %793
    %v795 = vsel %vm323, %v761, -inf
    %796 = vmax.xlane.f32.xlu0 %v795
    %v797 = vpop.xlane.xlu0 %796
    %v798 = vsel %vm323, %v762, -inf
    %799 = vmax.xlane.f32.xlu0 %v798
    %v800 = vpop.xlane.xlu0 %799
    %v801 = vsel %vm323, %v763, -inf
    %802 = vmax.xlane.f32.xlu0 %v801
    %v803 = vpop.xlane.xlu0 %802
    %v804 = vsel %vm323, %v764, -inf
    %805 = vmax.xlane.f32.xlu0 %v804
    %v806 = vpop.xlane.xlu0 %805
    %v807 = vsel %vm323, %v765, -inf
    %808 = vmax.xlane.f32.xlu0 %v807
    %v809 = vpop.xlane.xlu0 %808
    %v810 = vsel %vm323, %v766, -inf
    %811 = vmax.xlane.f32.xlu0 %v810
    %v812 = vpop.xlane.xlu0 %811
    %v813 = vsel %vm323, %v767, -inf
    %814 = vmax.xlane.f32.xlu0 %v813
    %v815 = vpop.xlane.xlu0 %814
    %v816 = vsub.f32 %v752, %v770
    %v817 = vsub.f32 %v753, %v773
    %v818 = vsub.f32 %v754, %v776
    %v819 = vsub.f32 %v755, %v779
    %v820 = vsub.f32 %v756, %v782
    %v821 = vsub.f32 %v757, %v785
    %v822 = vsub.f32 %v758, %v788
    %v823 = vsub.f32 %v759, %v791
    %v824 = vsub.f32 %v760, %v794
    %v825 = vsub.f32 %v761, %v797
    %v826 = vsub.f32 %v762, %v800
    %v827 = vsub.f32 %v763, %v803
    %v828 = vsub.f32 %v764, %v806
    %v829 = vsub.f32 %v765, %v809
    %v830 = vsub.f32 %v766, %v812
    %v831 = vsub.f32 %v767, %v815
    %v832 = vmul.f32 %v816, 1.442695
    %v833 = vpow.pop %v832
    %v834 = vmul.f32 %v817, 1.442695
    %v835 = vpow.pop %v834
    %v836 = vmul.f32 %v818, 1.442695
    %v837 = vpow.pop %v836
    %v838 = vmul.f32 %v819, 1.442695
    %v839 = vpow.pop %v838
    %v840 = vmul.f32 %v820, 1.442695
    %v841 = vpow.pop %v840
    %v842 = vmul.f32 %v821, 1.442695
    %v843 = vpow.pop %v842
    %v844 = vmul.f32 %v822, 1.442695
    %v845 = vpow.pop %v844
    %v846 = vmul.f32 %v823, 1.442695
    %v847 = vpow.pop %v846
    %v848 = vmul.f32 %v824, 1.442695
    %v849 = vpow.pop %v848
    %v850 = vmul.f32 %v825, 1.442695
    %v851 = vpow.pop %v850
    %v852 = vmul.f32 %v826, 1.442695
    %v853 = vpow.pop %v852
    %v854 = vmul.f32 %v827, 1.442695
    %v855 = vpow.pop %v854
    %v856 = vmul.f32 %v828, 1.442695
    %v857 = vpow.pop %v856
    %v858 = vmul.f32 %v829, 1.442695
    %v859 = vpow.pop %v858
    %v860 = vmul.f32 %v830, 1.442695
    %v861 = vpow.pop %v860
    %v862 = vmul.f32 %v831, 1.442695
    %v863 = vpow.pop %v862
    %v864 = vsel %vm323, %v833, 0.0
    %865 = vadd.xlane.f32.xlu0 %v864
    %v866 = vpop.xlane.xlu0 %865
    %v867 = vsel %vm323, %v835, 0.0
    %868 = vadd.xlane.f32.xlu0 %v867
    %v869 = vpop.xlane.xlu0 %868
    %v870 = vsel %vm323, %v837, 0.0
    %871 = vadd.xlane.f32.xlu0 %v870
    %v872 = vpop.xlane.xlu0 %871
    %v873 = vsel %vm323, %v839, 0.0
    %874 = vadd.xlane.f32.xlu0 %v873
    %v875 = vpop.xlane.xlu0 %874
    %v876 = vsel %vm323, %v841, 0.0
    %877 = vadd.xlane.f32.xlu0 %v876
    %v878 = vpop.xlane.xlu0 %877
    %v879 = vsel %vm323, %v843, 0.0
    %880 = vadd.xlane.f32.xlu0 %v879
    %v881 = vpop.xlane.xlu0 %880
    %v882 = vsel %vm323, %v845, 0.0
    %883 = vadd.xlane.f32.xlu0 %v882
    %v884 = vpop.xlane.xlu0 %883
    %v885 = vsel %vm323, %v847, 0.0
    %886 = vadd.xlane.f32.xlu0 %v885
    %v887 = vpop.xlane.xlu0 %886
    %v888 = vsel %vm323, %v849, 0.0
    %889 = vadd.xlane.f32.xlu0 %v888
    %v890 = vpop.xlane.xlu0 %889
    %v891 = vsel %vm323, %v851, 0.0
    %892 = vadd.xlane.f32.xlu0 %v891
    %v893 = vpop.xlane.xlu0 %892
    %v894 = vsel %vm323, %v853, 0.0
    %895 = vadd.xlane.f32.xlu0 %v894
    %v896 = vpop.xlane.xlu0 %895
    %v897 = vsel %vm323, %v855, 0.0
    %898 = vadd.xlane.f32.xlu0 %v897
    %v899 = vpop.xlane.xlu0 %898
    %v900 = vsel %vm323, %v857, 0.0
    %901 = vadd.xlane.f32.xlu0 %v900
    %v902 = vpop.xlane.xlu0 %901
    %v903 = vsel %vm323, %v859, 0.0
    %904 = vadd.xlane.f32.xlu0 %v903
    %v905 = vpop.xlane.xlu0 %904
    %v906 = vsel %vm323, %v861, 0.0
    %907 = vadd.xlane.f32.xlu0 %v906
    %v908 = vpop.xlane.xlu0 %907
    %v909 = vsel %vm323, %v863, 0.0
    %910 = vadd.xlane.f32.xlu0 %v909
    %v911 = vpop.xlane.xlu0 %910
    %v912 = vrcp.pop %v866
    %v913 = vrcp.pop %v869
    %v914 = vrcp.pop %v872
    %v915 = vrcp.pop %v875
    %v916 = vrcp.pop %v878
    %v917 = vrcp.pop %v881
    %v918 = vrcp.pop %v884
    %v919 = vrcp.pop %v887
    %v920 = vrcp.pop %v890
    %v921 = vrcp.pop %v893
    %v922 = vrcp.pop %v896
    %v923 = vrcp.pop %v899
    %v924 = vrcp.pop %v902
    %v925 = vrcp.pop %v905
    %v926 = vrcp.pop %v908
    %v927 = vrcp.pop %v911
    %v928 = vmul.f32 %v833, %v912
    %v929 = vmul.f32 %v835, %v913
    %v930 = vmul.f32 %v837, %v914
    %v931 = vmul.f32 %v839, %v915
    %v932 = vmul.f32 %v841, %v916
    %v933 = vmul.f32 %v843, %v917
    %v934 = vmul.f32 %v845, %v918
    %v935 = vmul.f32 %v847, %v919
    %v936 = vmul.f32 %v849, %v920
    %v937 = vmul.f32 %v851, %v921
    %v938 = vmul.f32 %v853, %v922
    %v939 = vmul.f32 %v855, %v923
    %v940 = vmul.f32 %v857, %v924
    %v941 = vmul.f32 %v859, %v925
    %v942 = vmul.f32 %v861, %v926
    %v943 = vmul.f32 %v863, %v927
    %944 = vrot.lane.b32.xlu0 %v161, 64
    %v945 = vpop.permute.xlu0 %944
    %946 = vrot.lane.b32.xlu0 %v166, 64
    %v947 = vpop.permute.xlu0 %946
    %v951 = vsel %vm323, %v928, 0
    %v954 = vsel %vm323, %v929, 0
    %v957 = vsel %vm323, %v930, 0
    %v960 = vsel %vm323, %v931, 0
    %v963 = vsel %vm323, %v932, 0
    %v966 = vsel %vm323, %v933, 0
    %v969 = vsel %vm323, %v934, 0
    %v972 = vsel %vm323, %v935, 0
    %v975 = vsel %vm323, %v936, 0
    %v978 = vsel %vm323, %v937, 0
    %v981 = vsel %vm323, %v938, 0
    %v984 = vsel %vm323, %v939, 0
    %v987 = vsel %vm323, %v940, 0
    %v990 = vsel %vm323, %v941, 0
    %v993 = vsel %vm323, %v942, 0
    %v996 = vsel %vm323, %v943, 0
    %998 = vmatprep.subr.mxu0 0.0
    %999 = vmatpush1.msra.mxu0 %v945
    %1000 = vmatprep.subr.mxu0 0.0
    %1001 = vmatpush1.msra.mxu0 %v947
    %1002 = vmatprep.subr.mxu0 0.0
    %1003 = vmatpush1.msra.mxu0 0.0
    %1004 = vmatprep.subr.mxu0 0.0
    %1005 = vmatpush1.msra.mxu0 0.0
    %1006 = vmatprep.subr.mxu0 0.0
    %1007 = vmatpush1.msra.mxu0 0.0
    %1008 = vmatprep.subr.mxu0 0.0
    %1009 = vmatpush1.msra.mxu0 0.0
    %1010 = vmatprep.subr.mxu0 0.0
    %1011 = vmatpush1.msra.mxu0 0.0
    %1012 = vmatprep.subr.mxu0 0.0
    %1013 = vmatpush1.msra.mxu0 0.0
    %1014 = vmatprep.subr.mxu0 0.0
    %1015 = vmatpush1.msra.mxu0 0.0
    %1016 = vmatprep.subr.mxu0 0.0
    %1017 = vmatpush1.msra.mxu0 0.0
    %1018 = vmatprep.subr.mxu0 0.0
    %1019 = vmatpush1.msra.mxu0 0.0
    %1020 = vmatprep.subr.mxu0 0.0
    %1021 = vmatpush1.msra.mxu0 0.0
    %1022 = vmatprep.subr.mxu0 0.0
    %1023 = vmatpush1.msra.mxu0 0.0
    %1024 = vmatprep.subr.mxu0 0.0
    %1025 = vmatpush1.msra.mxu0 0.0
    %1026 = vmatprep.subr.mxu0 0.0
    %1027 = vmatpush1.msra.mxu0 0.0
    %1028 = vmatprep.subr.mxu0 0.0
    %1029 = vmatpush1.msra.mxu0 0.0
    %1030 = vmatprep.subr.mxu0 0.0
    %1031 = vmatpush1.msra.mxu0 0.0
    %1032 = vmatprep.subr.mxu0 0.0
    %1033 = vmatpush1.msra.mxu0 0.0
    %1034 = vmatprep.subr.mxu0 0.0
    %1035 = vmatpush1.msra.mxu0 0.0
    %1036 = vmatprep.subr.mxu0 0.0
    %1037 = vmatpush1.msra.mxu0 0.0
    %1038 = vmatprep.subr.mxu0 0.0
    %1039 = vmatpush1.msra.mxu0 0.0
    %1040 = vmatprep.subr.mxu0 0.0
    %1041 = vmatpush1.msra.mxu0 0.0
    %1042 = vmatprep.subr.mxu0 0.0
    %1043 = vmatpush1.msra.mxu0 0.0
    %1044 = vmatprep.subr.mxu0 0.0
    %1045 = vmatpush1.msra.mxu0 0.0
    %1046 = vmatprep.subr.mxu0 0.0
    %1047 = vmatpush1.msra.mxu0 0.0
    %1048 = vmatprep.subr.mxu0 0.0
    %1049 = vmatpush1.msra.mxu0 0.0
    %1050 = vmatprep.subr.mxu0 0.0
    %1051 = vmatpush1.msra.mxu0 0.0
    %1052 = vmatprep.subr.mxu0 0.0
    %1053 = vmatpush1.msra.mxu0 0.0
    %1054 = vmatprep.subr.mxu0 0.0
    %1055 = vmatpush1.msra.mxu0 0.0
    %1056 = vmatprep.subr.mxu0 0.0
    %1057 = vmatpush1.msra.mxu0 0.0
    %1058 = vmatprep.subr.mxu0 0.0
    %1059 = vmatpush1.msra.mxu0 0.0
    %1060 = vmatprep.subr.mxu0 0.0
    %1061 = vmatpush1.msra.mxu0 0.0
    %1062 = vmatprep.mubr.f32.mxu0 0.0
    %1063 = vmatmul.mubr.f32.gmra.mrb[0].mxu0 %v951
    %v1064 = vpop.f32.mrb[0].mxu0
    %v1065 = vadd.f32 0.0, %v1064
    %v1066 = vpop.f32.mrb[0].mxu0
    %1067 = vmatprep.mubr.f32.mxu0 0.0
    %1068 = vmatmul.mubr.f32.gmra.mrb[0].mxu0 %v954
    %v1069 = vpop.f32.mrb[0].mxu0
    %v1070 = vadd.f32 0.0, %v1069
    %v1071 = vpop.f32.mrb[0].mxu0
    %1072 = vmatprep.mubr.f32.mxu0 0.0
    %1073 = vmatmul.mubr.f32.gmra.mrb[0].mxu0 %v957
    %v1074 = vpop.f32.mrb[0].mxu0
    %v1075 = vadd.f32 0.0, %v1074
    %v1076 = vpop.f32.mrb[0].mxu0
    %1077 = vmatprep.mubr.f32.mxu0 0.0
    %1078 = vmatmul.mubr.f32.gmra.mrb[0].mxu0 %v960
    %v1079 = vpop.f32.mrb[0].mxu0
    %v1080 = vadd.f32 0.0, %v1079
    %v1081 = vpop.f32.mrb[0].mxu0
    %1082 = vmatprep.mubr.f32.mxu0 0.0
    %1083 = vmatmul.mubr.f32.gmra.mrb[0].mxu0 %v963
    %v1084 = vpop.f32.mrb[0].mxu0
    %v1085 = vadd.f32 0.0, %v1084
    %v1086 = vpop.f32.mrb[0].mxu0
    %1087 = vmatprep.mubr.f32.mxu0 0.0
    %1088 = vmatmul.mubr.f32.gmra.mrb[0].mxu0 %v966
    %v1089 = vpop.f32.mrb[0].mxu0
    %v1090 = vadd.f32 0.0, %v1089
    %v1091 = vpop.f32.mrb[0].mxu0
    %1092 = vmatprep.mubr.f32.mxu0 0.0
    %1093 = vmatmul.mubr.f32.gmra.mrb[0].mxu0 %v969
    %v1094 = vpop.f32.mrb[0].mxu0
    %v1095 = vadd.f32 0.0, %v1094
    %v1096 = vpop.f32.mrb[0].mxu0
    %1097 = vmatprep.mubr.f32.mxu0 0.0
    %1098 = vmatmul.mubr.f32.gmra.mrb[0].mxu0 %v972
    %v1099 = vpop.f32.mrb[0].mxu0
    %v1100 = vadd.f32 0.0, %v1099
    %v1101 = vpop.f32.mrb[0].mxu0
    %1102 = vmatprep.mubr.f32.mxu0 0.0
    %1103 = vmatmul.mubr.f32.gmra.mrb[0].mxu0 %v975
    %v1104 = vpop.f32.mrb[0].mxu0
    %v1105 = vadd.f32 0.0, %v1104
    %v1106 = vpop.f32.mrb[0].mxu0
    %1107 = vmatprep.mubr.f32.mxu0 0.0
    %1108 = vmatmul.mubr.f32.gmra.mrb[0].mxu0 %v978
    %v1109 = vpop.f32.mrb[0].mxu0
    %v1110 = vadd.f32 0.0, %v1109
    %v1111 = vpop.f32.mrb[0].mxu0
    %1112 = vmatprep.mubr.f32.mxu0 0.0
    %1113 = vmatmul.mubr.f32.gmra.mrb[0].mxu0 %v981
    %v1114 = vpop.f32.mrb[0].mxu0
    %v1115 = vadd.f32 0.0, %v1114
    %v1116 = vpop.f32.mrb[0].mxu0
    %1117 = vmatprep.mubr.f32.mxu0 0.0
    %1118 = vmatmul.mubr.f32.gmra.mrb[0].mxu0 %v984
    %v1119 = vpop.f32.mrb[0].mxu0
    %v1120 = vadd.f32 0.0, %v1119
    %v1121 = vpop.f32.mrb[0].mxu0
    %1122 = vmatprep.mubr.f32.mxu0 0.0
    %1123 = vmatmul.mubr.f32.gmra.mrb[0].mxu0 %v987
    %v1124 = vpop.f32.mrb[0].mxu0
    %v1125 = vadd.f32 0.0, %v1124
    %v1126 = vpop.f32.mrb[0].mxu0
    %1127 = vmatprep.mubr.f32.mxu0 0.0
    %1128 = vmatmul.mubr.f32.gmra.mrb[0].mxu0 %v990
    %v1129 = vpop.f32.mrb[0].mxu0
    %v1130 = vadd.f32 0.0, %v1129
    %v1131 = vpop.f32.mrb[0].mxu0
    %1132 = vmatprep.mubr.f32.mxu0 0.0
    %1133 = vmatmul.mubr.f32.gmra.mrb[0].mxu0 %v993
    %v1134 = vpop.f32.mrb[0].mxu0
    %v1135 = vadd.f32 0.0, %v1134
    %v1136 = vpop.f32.mrb[0].mxu0
    %1137 = vmatprep.mubr.f32.mxu0 0.0
    %1138 = vmatmul.mubr.f32.gmra.mrb[0].mxu0 %v996
    %v1139 = vpop.f32.mrb[0].mxu0
    %v1140 = vadd.f32 0.0, %v1139
    %v1141 = vpop.f32.mrb[0].mxu0
    %1142 = vdwg.mxu0
    %v1143 = vmul.f32 %v1065, %v302
    %v1144 = vmul.f32 %v1070, %v303
    %v1145 = vmul.f32 %v1075, %v304
    %v1146 = vmul.f32 %v1080, %v305
    %v1147 = vmul.f32 %v1085, %v306
    %v1148 = vmul.f32 %v1090, %v307
    %v1149 = vmul.f32 %v1095, %v308
    %v1150 = vmul.f32 %v1100, %v309
    %v1151 = vmul.f32 %v1105, %v310
    %v1152 = vmul.f32 %v1110, %v311
    %v1153 = vmul.f32 %v1115, %v312
    %v1154 = vmul.f32 %v1120, %v313
    %v1155 = vmul.f32 %v1125, %v314
    %v1156 = vmul.f32 %v1130, %v315
    %v1157 = vmul.f32 %v1135, %v316
    %v1158 = vmul.f32 %v1140, %v317
    %1159 = vmatprep.subr.mxu0 0.0
    %1160 = vmatpush1.msra.mxu0 %v1143
    %1161 = vmatprep.subr.mxu0 0.0
    %1162 = vmatpush1.msra.mxu0 %v1144
    %1163 = vmatprep.subr.mxu0 0.0
    %1164 = vmatpush1.msra.mxu0 %v1145
    %1165 = vmatprep.subr.mxu0 0.0
    %1166 = vmatpush1.msra.mxu0 %v1146
    %1167 = vmatprep.subr.mxu0 0.0
    %1168 = vmatpush1.msra.mxu0 %v1147
    %1169 = vmatprep.subr.mxu0 0.0
    %1170 = vmatpush1.msra.mxu0 %v1148
    %1171 = vmatprep.subr.mxu0 0.0
    %1172 = vmatpush1.msra.mxu0 %v1149
    %1173 = vmatprep.subr.mxu0 0.0
    %1174 = vmatpush1.msra.mxu0 %v1150
    %1175 = vmatprep.subr.mxu0 0.0
    %1176 = vmatpush1.msra.mxu0 %v1151
    %1177 = vmatprep.subr.mxu0 0.0
    %1178 = vmatpush1.msra.mxu0 %v1152
    %1179 = vmatprep.subr.mxu0 0.0
    %1180 = vmatpush1.msra.mxu0 %v1153
    %1181 = vmatprep.subr.mxu0 0.0
    %1182 = vmatpush1.msra.mxu0 %v1154
    %1183 = vmatprep.subr.mxu0 0.0
    %1184 = vmatpush1.msra.mxu0 %v1155
    %1185 = vmatprep.subr.mxu0 0.0
    %1186 = vmatpush1.msra.mxu0 %v1156
    %1187 = vmatprep.subr.mxu0 0.0
    %1188 = vmatpush1.msra.mxu0 %v1157
    %1189 = vmatprep.subr.mxu0 0.0
    %1190 = vmatpush1.msra.mxu0 %v1158
    %1191 = vmatprep.subr.mxu0 0.0
    %1192 = vmatpush1.msra.mxu0 0.0
    %1193 = vmatprep.subr.mxu0 0.0
    %1194 = vmatpush1.msra.mxu0 0.0
    %1195 = vmatprep.subr.mxu0 0.0
    %1196 = vmatpush1.msra.mxu0 0.0
    %1197 = vmatprep.subr.mxu0 0.0
    %1198 = vmatpush1.msra.mxu0 0.0
    %1199 = vmatprep.subr.mxu0 0.0
    %1200 = vmatpush1.msra.mxu0 0.0
    %1201 = vmatprep.subr.mxu0 0.0
    %1202 = vmatpush1.msra.mxu0 0.0
    %1203 = vmatprep.subr.mxu0 0.0
    %1204 = vmatpush1.msra.mxu0 0.0
    %1205 = vmatprep.subr.mxu0 0.0
    %1206 = vmatpush1.msra.mxu0 0.0
    %1207 = vmatprep.subr.mxu0 0.0
    %1208 = vmatpush1.msra.mxu0 0.0
    %1209 = vmatprep.subr.mxu0 0.0
    %1210 = vmatpush1.msra.mxu0 0.0
    %1211 = vmatprep.subr.mxu0 0.0
    %1212 = vmatpush1.msra.mxu0 0.0
    %1213 = vmatprep.subr.mxu0 0.0
    %1214 = vmatpush1.msra.mxu0 0.0
    %1215 = vmatprep.subr.mxu0 0.0
    %1216 = vmatpush1.msra.mxu0 0.0
    %1217 = vmatprep.subr.mxu0 0.0
    %1218 = vmatpush1.msra.mxu0 0.0
    %1219 = vmatprep.subr.mxu0 0.0
    %1220 = vmatpush1.msra.mxu0 0.0
    %1221 = vmatprep.subr.mxu0 0.0
    %1222 = vmatpush1.msra.mxu0 0.0
    %1223 = vmatprep.mubr.f32.mxu0 0.0
    %1224 = vmatmul.mubr.f32.gmra.mrb[0].mxu0 %v321
    %v1225 = vpop.f32.mrb[0].mxu0
    %v1226 = vadd.f32 0.0, %v1225
    %v1227 = vpop.f32.mrb[0].mxu0
    %1228 = vmatprep.mubr.f32.mxu0 0.0
    %1229 = vmatmul.mubr.f32.gmra.mrb[0].mxu0 %v322
    %v1230 = vpop.f32.mrb[0].mxu0
    %v1231 = vadd.f32 0.0, %v1230
    %v1232 = vpop.f32.mrb[0].mxu0
    %1233 = vdwg.mxu0
    %v1234 = vlaneseq
    %v1235 = vshrl.u32 %v1234, 7
    %v1236 = vsub.s32 0, %v1235
    %v1237 = vrot.slane %v23, %v1236
    %1242 = vrot.lane.b32.xlu0 %v28, 32
    %v1243 = vpop.permute.xlu0 %1242
    %1244 = vrot.lane.b32.xlu0 %v29, 32
    %v1245 = vpop.permute.xlu0 %1244
    %1246 = vrot.lane.b32.xlu0 %v30, 32
    %v1247 = vpop.permute.xlu0 %1246
    %1248 = vrot.lane.b32.xlu0 %v31, 32
    %v1249 = vpop.permute.xlu0 %1248
    %v1255 = vsel %vm44, %v1226, 0
    %v1258 = vsel %vm44, %v1231, 0
    %1260 = vmatprep.subr.mxu0 0.0
    %1261 = vmatpush1.msra.mxu0 %v1243
    %1262 = vmatprep.subr.mxu0 0.0
    %1263 = vmatpush1.msra.mxu0 %v1245
    %1264 = vmatprep.subr.mxu0 0.0
    %1265 = vmatpush1.msra.mxu0 %v1247
    %1266 = vmatprep.subr.mxu0 0.0
    %1267 = vmatpush1.msra.mxu0 %v1249
    %1268 = vmatprep.subr.mxu0 0.0
    %1269 = vmatpush1.msra.mxu0 0.0
    %1270 = vmatprep.subr.mxu0 0.0
    %1271 = vmatpush1.msra.mxu0 0.0
    %1272 = vmatprep.subr.mxu0 0.0
    %1273 = vmatpush1.msra.mxu0 0.0
    %1274 = vmatprep.subr.mxu0 0.0
    %1275 = vmatpush1.msra.mxu0 0.0
    %1276 = vmatprep.subr.mxu0 0.0
    %1277 = vmatpush1.msra.mxu0 0.0
    %1278 = vmatprep.subr.mxu0 0.0
    %1279 = vmatpush1.msra.mxu0 0.0
    %1280 = vmatprep.subr.mxu0 0.0
    %1281 = vmatpush1.msra.mxu0 0.0
    %1282 = vmatprep.subr.mxu0 0.0
    %1283 = vmatpush1.msra.mxu0 0.0
    %1284 = vmatprep.subr.mxu0 0.0
    %1285 = vmatpush1.msra.mxu0 0.0
    %1286 = vmatprep.subr.mxu0 0.0
    %1287 = vmatpush1.msra.mxu0 0.0
    %1288 = vmatprep.subr.mxu0 0.0
    %1289 = vmatpush1.msra.mxu0 0.0
    %1290 = vmatprep.subr.mxu0 0.0
    %1291 = vmatpush1.msra.mxu0 0.0
    %1292 = vmatprep.subr.mxu0 0.0
    %1293 = vmatpush1.msra.mxu0 0.0
    %1294 = vmatprep.subr.mxu0 0.0
    %1295 = vmatpush1.msra.mxu0 0.0
    %1296 = vmatprep.subr.mxu0 0.0
    %1297 = vmatpush1.msra.mxu0 0.0
    %1298 = vmatprep.subr.mxu0 0.0
    %1299 = vmatpush1.msra.mxu0 0.0
    %1300 = vmatprep.subr.mxu0 0.0
    %1301 = vmatpush1.msra.mxu0 0.0
    %1302 = vmatprep.subr.mxu0 0.0
    %1303 = vmatpush1.msra.mxu0 0.0
    %1304 = vmatprep.subr.mxu0 0.0
    %1305 = vmatpush1.msra.mxu0 0.0
    %1306 = vmatprep.subr.mxu0 0.0
    %1307 = vmatpush1.msra.mxu0 0.0
    %1308 = vmatprep.subr.mxu0 0.0
    %1309 = vmatpush1.msra.mxu0 0.0
    %1310 = vmatprep.subr.mxu0 0.0
    %1311 = vmatpush1.msra.mxu0 0.0
    %1312 = vmatprep.subr.mxu0 0.0
    %1313 = vmatpush1.msra.mxu0 0.0
    %1314 = vmatprep.subr.mxu0 0.0
    %1315 = vmatpush1.msra.mxu0 0.0
    %1316 = vmatprep.subr.mxu0 0.0
    %1317 = vmatpush1.msra.mxu0 0.0
    %1318 = vmatprep.subr.mxu0 0.0
    %1319 = vmatpush1.msra.mxu0 0.0
    %1320 = vmatprep.subr.mxu0 0.0
    %1321 = vmatpush1.msra.mxu0 0.0
    %1322 = vmatprep.subr.mxu0 0.0
    %1323 = vmatpush1.msra.mxu0 0.0
    %1324 = vmatprep.mubr.f32.mxu0 0.0
    %1325 = vmatmul.mubr.f32.gmra.mrb[0].mxu0 %v1255
    %v1326 = vpop.f32.mrb[0].mxu0
    %v1327 = vadd.f32 %v1237, %v1326
    %v1328 = vpop.f32.mrb[0].mxu0
    %1329 = vmatprep.mubr.f32.mxu0 0.0
    %1330 = vmatmul.mubr.f32.gmra.mrb[0].mxu0 %v1258
    %v1331 = vpop.f32.mrb[0].mxu0
    %v1332 = vadd.f32 %v1237, %v1331
    %v1333 = vpop.f32.mrb[0].mxu0
    %1334 = vdwg.mxu0
    %v1335 = vadd.f32 %v1327, %v18
    %v1336 = vadd.f32 %v1332, %v19
    %v1337 = vsel %vm44, %v1335, 0.0
    %1338 = vadd.xlane.f32.xlu0 %v1337
    %v1339 = vpop.xlane.xlu0 %1338
    %v1340 = vsel %vm44, %v1336, 0.0
    %1341 = vadd.xlane.f32.xlu0 %v1340
    %v1342 = vpop.xlane.xlu0 %1341
    %v1343 = vmul.f32 %v1339, %v51
    %v1344 = vmul.f32 %v1342, %v51
    %v1345 = vsub.f32 %v1335, %v1343
    %v1346 = vsub.f32 %v1336, %v1344
    %v1347 = vmul.f32 %v1345, %v1345
    %v1348 = vmul.f32 %v1346, %v1346
    %v1349 = vsel %vm44, %v1347, 0.0
    %1350 = vadd.xlane.f32.xlu0 %v1349
    %v1351 = vpop.xlane.xlu0 %1350
    %v1352 = vsel %vm44, %v1348, 0.0
    %1353 = vadd.xlane.f32.xlu0 %v1352
    %v1354 = vpop.xlane.xlu0 %1353
    %v1355 = vmul.f32 %v1351, %v51
    %v1356 = vmul.f32 %v1354, %v51
    %v1357 = vadd.f32 %v1355, 1e-05
    %v1358 = vadd.f32 %v1356, 1e-05
    %v1359 = vrsqrt.pop %v1357
    %v1360 = vrsqrt.pop %v1358
    %v1361 = vmul.f32 %v1345, %v1359
    %v1362 = vmul.f32 %v1346, %v1360
    %v1363 = vlaneseq
    %v1364 = vshrl.u32 %v1363, 7
    %v1365 = vsub.s32 0, %v1364
    %v1366 = vrot.slane %v24, %v1365
    %v1367 = vmul.f32 %v1361, %v1366
    %v1368 = vmul.f32 %v1362, %v1366
    %v1369 = vlaneseq
    %v1370 = vshrl.u32 %v1369, 7
    %v1371 = vsub.s32 0, %v1370
    %v1372 = vrot.slane %v25, %v1371
    %v1373 = vadd.f32 %v1367, %v1372
    %v1374 = vadd.f32 %v1368, %v1372
    %v1375 = vlaneseq
    %v1376 = vshrl.u32 %v1375, 7
    %v1377 = vsub.s32 0, %v1376
    %v1378 = vrot.slane %v26, %v1377
    %v1380 = vsel %vm44, %v1373, 0
    %v1383 = vsel %vm44, %v1374, 0
    %1385 = vmatprep.subr.mxu0 0.0
    %1386 = vmatpush1.msra.mxu0 %v32
    %1387 = vmatprep.subr.mxu0 0.0
    %1388 = vmatpush1.msra.mxu0 %v33
    %1389 = vmatprep.subr.mxu0 0.0
    %1390 = vmatpush1.msra.mxu0 %v34
    %1391 = vmatprep.subr.mxu0 0.0
    %1392 = vmatpush1.msra.mxu0 %v35
    %1393 = vmatprep.subr.mxu0 0.0
    %1394 = vmatpush1.msra.mxu0 0.0
    %1395 = vmatprep.subr.mxu0 0.0
    %1396 = vmatpush1.msra.mxu0 0.0
    %1397 = vmatprep.subr.mxu0 0.0
    %1398 = vmatpush1.msra.mxu0 0.0
    %1399 = vmatprep.subr.mxu0 0.0
    %1400 = vmatpush1.msra.mxu0 0.0
    %1401 = vmatprep.subr.mxu0 0.0
    %1402 = vmatpush1.msra.mxu0 0.0
    %1403 = vmatprep.subr.mxu0 0.0
    %1404 = vmatpush1.msra.mxu0 0.0
    %1405 = vmatprep.subr.mxu0 0.0
    %1406 = vmatpush1.msra.mxu0 0.0
    %1407 = vmatprep.subr.mxu0 0.0
    %1408 = vmatpush1.msra.mxu0 0.0
    %1409 = vmatprep.subr.mxu0 0.0
    %1410 = vmatpush1.msra.mxu0 0.0
    %1411 = vmatprep.subr.mxu0 0.0
    %1412 = vmatpush1.msra.mxu0 0.0
    %1413 = vmatprep.subr.mxu0 0.0
    %1414 = vmatpush1.msra.mxu0 0.0
    %1415 = vmatprep.subr.mxu0 0.0
    %1416 = vmatpush1.msra.mxu0 0.0
    %1417 = vmatprep.subr.mxu0 0.0
    %1418 = vmatpush1.msra.mxu0 0.0
    %1419 = vmatprep.subr.mxu0 0.0
    %1420 = vmatpush1.msra.mxu0 0.0
    %1421 = vmatprep.subr.mxu0 0.0
    %1422 = vmatpush1.msra.mxu0 0.0
    %1423 = vmatprep.subr.mxu0 0.0
    %1424 = vmatpush1.msra.mxu0 0.0
    %1425 = vmatprep.subr.mxu0 0.0
    %1426 = vmatpush1.msra.mxu0 0.0
    %1427 = vmatprep.subr.mxu0 0.0
    %1428 = vmatpush1.msra.mxu0 0.0
    %1429 = vmatprep.subr.mxu0 0.0
    %1430 = vmatpush1.msra.mxu0 0.0
    %1431 = vmatprep.subr.mxu0 0.0
    %1432 = vmatpush1.msra.mxu0 0.0
    %1433 = vmatprep.subr.mxu0 0.0
    %1434 = vmatpush1.msra.mxu0 0.0
    %1435 = vmatprep.subr.mxu0 0.0
    %1436 = vmatpush1.msra.mxu0 0.0
    %1437 = vmatprep.subr.mxu0 0.0
    %1438 = vmatpush1.msra.mxu0 0.0
    %1439 = vmatprep.subr.mxu0 0.0
    %1440 = vmatpush1.msra.mxu0 0.0
    %1441 = vmatprep.subr.mxu0 0.0
    %1442 = vmatpush1.msra.mxu0 0.0
    %1443 = vmatprep.subr.mxu0 0.0
    %1444 = vmatpush1.msra.mxu0 0.0
    %1445 = vmatprep.subr.mxu0 0.0
    %1446 = vmatpush1.msra.mxu0 0.0
    %1447 = vmatprep.subr.mxu0 0.0
    %1448 = vmatpush1.msra.mxu0 0.0
    %1449 = vmatprep.mubr.f32.mxu0 0.0
    %1450 = vmatmul.mubr.f32.gmra.mrb[0].mxu0 %v1380
    %v1451 = vpop.f32.mrb[0].mxu0
    %v1452 = vadd.f32 %v1378, %v1451
    %v1453 = vpop.f32.mrb[0].mxu0
    %1454 = vmatprep.mubr.f32.mxu0 0.0
    %1455 = vmatmul.mubr.f32.gmra.mrb[0].mxu0 %v1383
    %v1456 = vpop.f32.mrb[0].mxu0
    %v1457 = vadd.f32 %v1378, %v1456
    %v1458 = vpop.f32.mrb[0].mxu0
    %1459 = vdwg.mxu0
    %v1460 = vmul.f32 %v1452, 0.5
    %v1461 = vmul.f32 %v1457, 0.5
    %v1462 = vmul.f32 %v1452, 0.70710677
    %v1463 = vmul.f32 %v1457, 0.70710677
    %vm1464 = vcmp.ge.f32.partialorder %v1462, 0.0
    %vm1465 = vcmp.ge.f32.partialorder %v1463, 0.0
    %v1466 = vsel %vm1464, 1.0, -1.0
    %v1467 = vsel %vm1465, 1.0, -1.0
    %v1468 = vand.u32 2147483647, %v1462
    %v1469 = vand.u32 2147483647, %v1463
    %v1470 = vmul.f32 %v1468, 0.3275911
    %v1471 = vmul.f32 %v1469, 0.3275911
    %v1472 = vadd.f32 %v1470, 1.0
    %v1473 = vadd.f32 %v1471, 1.0
    %v1474 = vrcp.pop %v1472
    %v1475 = vmul.f32 1.0, %v1474
    %v1476 = vrcp.pop %v1473
    %v1477 = vmul.f32 1.0, %v1476
    %v1478 = vmul.f32 %v1475, 1.0614054
    %v1479 = vmul.f32 %v1477, 1.0614054
    %v1480 = vadd.f32 %v1478, -1.4531521
    %v1481 = vadd.f32 %v1479, -1.4531521
    %v1482 = vmul.f32 %v1480, %v1475
    %v1483 = vmul.f32 %v1481, %v1477
    %v1484 = vadd.f32 %v1482, 1.4214138
    %v1485 = vadd.f32 %v1483, 1.4214138
    %v1486 = vmul.f32 %v1484, %v1475
    %v1487 = vmul.f32 %v1485, %v1477
    %v1488 = vadd.f32 %v1486, -0.28449672
    %v1489 = vadd.f32 %v1487, -0.28449672
    %v1490 = vmul.f32 %v1488, %v1475
    %v1491 = vmul.f32 %v1489, %v1477
    %v1492 = vadd.f32 %v1490, 0.2548296
    %v1493 = vadd.f32 %v1491, 0.2548296
    %v1494 = vmul.f32 %v1492, %v1475
    %v1495 = vmul.f32 %v1493, %v1477
    %v1496 = vsub.f32 0.0, %v1468
    %v1497 = vsub.f32 0.0, %v1469
    %v1498 = vmul.f32 %v1496, %v1468
    %v1499 = vmul.f32 %v1497, %v1469
    %v1500 = vmul.f32 %v1498, 1.442695
    %v1501 = vpow.pop %v1500
    %v1502 = vmul.f32 %v1499, 1.442695
    %v1503 = vpow.pop %v1502
    %v1504 = vmul.f32 %v1494, %v1501
    %v1505 = vmul.f32 %v1495, %v1503
    %v1506 = vsub.f32 1.0, %v1504
    %v1507 = vsub.f32 1.0, %v1505
    %v1508 = vmul.f32 %v1466, %v1506
    %v1509 = vmul.f32 %v1467, %v1507
    %v1510 = vadd.f32 %v1508, 1.0
    %v1511 = vadd.f32 %v1509, 1.0
    %v1512 = vmul.f32 %v1460, %v1510
    %v1513 = vmul.f32 %v1461, %v1511
    %v1514 = vlaneseq
    %v1515 = vshrl.u32 %v1514, 7
    %v1516 = vsub.s32 0, %v1515
    %v1517 = vrot.slane %v27, %v1516
    %vm1518 = vcmask 523264
    %v1520 = vsel %vm1518, %v1512, 0
    %v1523 = vsel %vm1518, %v1513, 0
    %1525 = vmatprep.subr.mxu0 0.0
    %1526 = vmatpush1.msra.mxu0 %v36
    %1527 = vmatprep.subr.mxu0 0.0
    %1528 = vmatpush1.msra.mxu0 %v37
    %1529 = vmatprep.subr.mxu0 0.0
    %1530 = vmatpush1.msra.mxu0 %v38
    %1531 = vmatprep.subr.mxu0 0.0
    %1532 = vmatpush1.msra.mxu0 %v39
    %1533 = vmatprep.subr.mxu0 0.0
    %1534 = vmatpush1.msra.mxu0 %v40
    %1535 = vmatprep.subr.mxu0 0.0
    %1536 = vmatpush1.msra.mxu0 %v41
    %1537 = vmatprep.subr.mxu0 0.0
    %1538 = vmatpush1.msra.mxu0 %v42
    %1539 = vmatprep.subr.mxu0 0.0
    %1540 = vmatpush1.msra.mxu0 %v43
    %1541 = vmatprep.subr.mxu0 0.0
    %1542 = vmatpush1.msra.mxu0 0.0
    %1543 = vmatprep.subr.mxu0 0.0
    %1544 = vmatpush1.msra.mxu0 0.0
    %1545 = vmatprep.subr.mxu0 0.0
    %1546 = vmatpush1.msra.mxu0 0.0
    %1547 = vmatprep.subr.mxu0 0.0
    %1548 = vmatpush1.msra.mxu0 0.0
    %1549 = vmatprep.subr.mxu0 0.0
    %1550 = vmatpush1.msra.mxu0 0.0
    %1551 = vmatprep.subr.mxu0 0.0
    %1552 = vmatpush1.msra.mxu0 0.0
    %1553 = vmatprep.subr.mxu0 0.0
    %1554 = vmatpush1.msra.mxu0 0.0
    %1555 = vmatprep.subr.mxu0 0.0
    %1556 = vmatpush1.msra.mxu0 0.0
    %1557 = vmatprep.subr.mxu0 0.0
    %1558 = vmatpush1.msra.mxu0 0.0
    %1559 = vmatprep.subr.mxu0 0.0
    %1560 = vmatpush1.msra.mxu0 0.0
    %1561 = vmatprep.subr.mxu0 0.0
    %1562 = vmatpush1.msra.mxu0 0.0
    %1563 = vmatprep.subr.mxu0 0.0
    %1564 = vmatpush1.msra.mxu0 0.0
    %1565 = vmatprep.subr.mxu0 0.0
    %1566 = vmatpush1.msra.mxu0 0.0
    %1567 = vmatprep.subr.mxu0 0.0
    %1568 = vmatpush1.msra.mxu0 0.0
    %1569 = vmatprep.subr.mxu0 0.0
    %1570 = vmatpush1.msra.mxu0 0.0
    %1571 = vmatprep.subr.mxu0 0.0
    %1572 = vmatpush1.msra.mxu0 0.0
    %1573 = vmatprep.subr.mxu0 0.0
    %1574 = vmatpush1.msra.mxu0 0.0
    %1575 = vmatprep.subr.mxu0 0.0
    %1576 = vmatpush1.msra.mxu0 0.0
    %1577 = vmatprep.subr.mxu0 0.0
    %1578 = vmatpush1.msra.mxu0 0.0
    %1579 = vmatprep.subr.mxu0 0.0
    %1580 = vmatpush1.msra.mxu0 0.0
    %1581 = vmatprep.subr.mxu0 0.0
    %1582 = vmatpush1.msra.mxu0 0.0
    %1583 = vmatprep.subr.mxu0 0.0
    %1584 = vmatpush1.msra.mxu0 0.0
    %1585 = vmatprep.subr.mxu0 0.0
    %1586 = vmatpush1.msra.mxu0 0.0
    %1587 = vmatprep.subr.mxu0 0.0
    %1588 = vmatpush1.msra.mxu0 0.0
    %1589 = vmatprep.mubr.f32.mxu0 0.0
    %1590 = vmatmul.mubr.f32.gmra.mrb[0].mxu0 %v1520
    %v1591 = vpop.f32.mrb[0].mxu0
    %v1592 = vadd.f32 %v1517, %v1591
    %v1593 = vpop.f32.mrb[0].mxu0
    %1594 = vmatprep.mubr.f32.mxu0 0.0
    %1595 = vmatmul.mubr.f32.gmra.mrb[0].mxu0 %v1523
    %v1596 = vpop.f32.mrb[0].mxu0
    %v1597 = vadd.f32 %v1517, %v1596
    %v1598 = vpop.f32.mrb[0].mxu0
    %1599 = vdwg.mxu0
    %v1600 = vmul.f32 %v1592, 0.5
    %v1601 = vmul.f32 %v1597, 0.5
    %v1602 = vmul.f32 %v1592, 0.70710677
    %v1603 = vmul.f32 %v1597, 0.70710677
    %vm1604 = vcmp.ge.f32.partialorder %v1602, 0.0
    %vm1605 = vcmp.ge.f32.partialorder %v1603, 0.0
    %v1606 = vsel %vm1604, 1.0, -1.0
    %v1607 = vsel %vm1605, 1.0, -1.0
    %v1608 = vand.u32 2147483647, %v1602
    %v1609 = vand.u32 2147483647, %v1603
    %v1610 = vmul.f32 %v1608, 0.3275911
    %v1611 = vmul.f32 %v1609, 0.3275911
    %v1612 = vadd.f32 %v1610, 1.0
    %v1613 = vadd.f32 %v1611, 1.0
    %v1614 = vrcp.pop %v1612
    %v1615 = vmul.f32 1.0, %v1614
    %v1616 = vrcp.pop %v1613
    %v1617 = vmul.f32 1.0, %v1616
    %v1618 = vmul.f32 %v1615, 1.0614054
    %v1619 = vmul.f32 %v1617, 1.0614054
    %v1620 = vadd.f32 %v1618, -1.4531521
    %v1621 = vadd.f32 %v1619, -1.4531521
    %v1622 = vmul.f32 %v1620, %v1615
    %v1623 = vmul.f32 %v1621, %v1617
    %v1624 = vadd.f32 %v1622, 1.4214138
    %v1625 = vadd.f32 %v1623, 1.4214138
    %v1626 = vmul.f32 %v1624, %v1615
    %v1627 = vmul.f32 %v1625, %v1617
    %v1628 = vadd.f32 %v1626, -0.28449672
    %v1629 = vadd.f32 %v1627, -0.28449672
    %v1630 = vmul.f32 %v1628, %v1615
    %v1631 = vmul.f32 %v1629, %v1617
    %v1632 = vadd.f32 %v1630, 0.2548296
    %v1633 = vadd.f32 %v1631, 0.2548296
    %v1634 = vmul.f32 %v1632, %v1615
    %v1635 = vmul.f32 %v1633, %v1617
    %v1636 = vsub.f32 0.0, %v1608
    %v1637 = vsub.f32 0.0, %v1609
    %v1638 = vmul.f32 %v1636, %v1608
    %v1639 = vmul.f32 %v1637, %v1609
    %v1640 = vmul.f32 %v1638, 1.442695
    %v1641 = vpow.pop %v1640
    %v1642 = vmul.f32 %v1639, 1.442695
    %v1643 = vpow.pop %v1642
    %v1644 = vmul.f32 %v1634, %v1641
    %v1645 = vmul.f32 %v1635, %v1643
    %v1646 = vsub.f32 1.0, %v1644
    %v1647 = vsub.f32 1.0, %v1645
    %v1648 = vmul.f32 %v1606, %v1646
    %v1649 = vmul.f32 %v1607, %v1647
    %v1650 = vadd.f32 %v1648, 1.0
    %v1651 = vadd.f32 %v1649, 1.0
    %v1652 = vmul.f32 %v1600, %v1650
    %v1653 = vmul.f32 %v1601, %v1651
    %v1654 = vadd.f32 %v1652, %v1335
    %v1655 = vadd.f32 %v1653, %v1336
    %1656 = vst.msk [vmem:[#allocation2] sm:$0xff] %vm44, %v1654
    %1657 = vst.msk [vmem:[#allocation2 + $0x8] sm:$0xff] %vm44, %v1655
    // Predicated region
    $region18: #{tpu_custom_call.1} parent=1 // pred_check
      _
    $region19: #{tpu_custom_call.1} parent=1 // pred_check_branch
      %1659 = sbr.rel (0) target = $region21
    $region20: #{tpu_custom_call.1} parent=1 // pred_region
      %s1661 = ssub.s32 256, 256
      %1662 = vsyncadd [#allocation3], %s1661
      %s1663 = sshll.u32 [#allocation2], 4
      %s1664 = int_to_ptr.vmem [resolvable:$true] %s1663
      %1669 = dma.vmem_to_hbm [thread:$0]  %s1664, 256, %s4, [#allocation3], 128, 128, 8
    $region21: #{tpu_custom_call.1} parent=1 // pred_fallthru
      _
    // Predicated region
    $region22: #{tpu_custom_call.1} parent=1 // pred_check
      _
    $region23: #{tpu_custom_call.1} parent=1 // pred_check_branch
      %1671 = sbr.rel (0) target = $region25
    $region24: #{tpu_custom_call.1} parent=1 // pred_region
      %1672 = dma.done [#allocation3], 256
    $region25: #{tpu_custom_call.1} parent=1 // pred_fallthru
      _
    %1673 = vsyncpa [#allocation3], 1

</llo_original>
